<compile_context>
chip_gen: v6e
topology: v6e:2x2x1
jax: 0.10.0
libtpu: 0.0.40
codegen_flags: <defaults>
</compile_context>

<pallas_src>
import functools

import jax
import jax.numpy as jnp
from jax import lax
from jax.experimental import pallas as pl
from jax.experimental.pallas import tpu as pltpu

FOCAL_LENGTH = 1000.0
NUM_JOINTS = 24

# ----------------------------------------------------------------------------
# Packed "small feature" row layout: one row per scalar feature, samples along
# the 128-wide lane axis.  Every section offset is a multiple of 8 so in-kernel
# sublane slices stay tile-aligned.
# ----------------------------------------------------------------------------
_K = NUM_JOINTS
OFF_PJ = 0                   # pred joints           x|y|z      3*K = 72 rows
OFF_GK2 = OFF_PJ + 3 * _K    # gt 2D keypoints       x|y|conf   3*K = 72 rows
OFF_GK3 = OFF_GK2 + 3 * _K   # gt 3D keypoints       x|y|z|conf 4*K = 96 rows
OFF_PR = OFF_GK3 + 4 * _K    # pred rotmats (flat)              216 rows
OFF_GR = OFF_PR + 9 * _K     # gt   rotmats (flat)              216 rows
OFF_PB = OFF_GR + 9 * _K     # pred betas  (10 padded to 16)    16 rows
OFF_GB = OFF_PB + 16         # gt   betas  (10 padded to 16)    16 rows
OFF_TR = OFF_GB + 16         # camera translation (3 pad to 8)  8 rows
FEAT_ROWS = OFF_TR + 8       # = 712 (multiple of 8)

TB = 128         # samples per grid step (lane axis of feat / sums)
VC_TARGET = 2048  # vertex-feature lanes per chunk (bf16, 128 rows -> 512 KiB/input/step)


def _round_up(x, m):
    return ((x + m - 1) // m) * m


def _cdiv(a, b):
    return -(-a // b)


# ----------------------------------------------------------------------------
# Pallas kernel
# ----------------------------------------------------------------------------
def _smpl_loss_kernel(feat_ref, pv_ref, gv_ref, sums_ref, vcol_ref, *,
                      img_w, img_h, focal_length, vd, chunks_per_split,
                      need_mask):
    """Per-detection partial sums of all SMPL loss terms.

    grid = (chunk_split, sample_block, vertex_chunk)
      feat_ref : (FEAT_ROWS, TB) f32     — resident across vertex chunks
      pv_ref   : (NV_ROWS, VC)  bf16     — pred vertices chunk
      gv_ref   : (NV_ROWS, VC)  bf16     — gt vertices chunk
      sums_ref : (8, TB)        f32      — rows: s2d, s3d, s_pose, s_betas, s_vert, 0,0,0
      vcol_ref : (NV_ROWS, 1)   f32      — per-sample vertex-L1 accumulator (scratch)
    """
    c = pl.program_id(0)           # vertex-chunk split (core split)
    j = pl.program_id(2)           # vertex chunk within split
    K = NUM_JOINTS
    f32 = jnp.float32
    chunk_lanes = pv_ref.shape[1]

    # ---------------- feat path: once per sample block (chunk 0) -------------
    @pl.when(j == 0)
    def _init():
        vcol_ref[...] = jnp.zeros_like(vcol_ref)

        inv_w = 1.0 / img_w
        inv_h = 1.0 / img_h
        jx = feat_ref[OFF_PJ:OFF_PJ + K, :]
        jy = feat_ref[OFF_PJ + K:OFF_PJ + 2 * K, :]
        jz = feat_ref[OFF_PJ + 2 * K:OFF_PJ + 3 * K, :]
        tr = feat_ref[OFF_TR:OFF_TR + 8, :]
        tx, ty, tz = tr[0:1, :], tr[1:2, :], tr[2:3, :]

        # 2D keypoint term: perspective projection (identity R), /img_size.
        # No depth guard (matches the torch divide); padded lanes may produce
        # NaN but are sliced off in the wrapper.
        inv_z = pl.reciprocal(jz + tz, approx=False)          # EUP slot
        proj_xn = (focal_length * (jx + tx) * inv_z) * inv_w + 0.5
        proj_yn = (focal_length * (jy + ty) * inv_z) * inv_h + 0.5
        g2x = feat_ref[OFF_GK2:OFF_GK2 + K, :] * inv_w
        g2y = feat_ref[OFF_GK2 + K:OFF_GK2 + 2 * K, :] * inv_h
        c2 = feat_ref[OFF_GK2 + 2 * K:OFF_GK2 + 3 * K, :]
        s2d = jnp.sum(c2 * (jnp.abs(proj_xn - g2x) + jnp.abs(proj_yn - g2y)),
                      axis=0, keepdims=True)                  # (1, TB)

        # 3D keypoint term: pelvis-centred, conf-weighted L1
        g3x = feat_ref[OFF_GK3:OFF_GK3 + K, :]
        g3y = feat_ref[OFF_GK3 + K:OFF_GK3 + 2 * K, :]
        g3z = feat_ref[OFF_GK3 + 2 * K:OFF_GK3 + 3 * K, :]
        c3 = feat_ref[OFF_GK3 + 3 * K:OFF_GK3 + 4 * K, :]
        gpx = (g3x[2:3, :] + g3x[3:4, :]) * 0.5
        gpy = (g3y[2:3, :] + g3y[3:4, :]) * 0.5
        gpz = (g3z[2:3, :] + g3z[3:4, :]) * 0.5
        ppx = (jx[2:3, :] + jx[3:4, :]) * 0.5
        ppy = (jy[2:3, :] + jy[3:4, :]) * 0.5
        ppz = (jz[2:3, :] + jz[3:4, :]) * 0.5
        dx = (jx - ppx) - (g3x - gpx)
        dy = (jy - ppy) - (g3y - gpy)
        dz = (jz - ppz) - (g3z - gpz)
        s3d = jnp.sum(c3 * (jnp.abs(dx) + jnp.abs(dy) + jnp.abs(dz)),
                      axis=0, keepdims=True)                  # (1, TB)

        # rotmat / betas squared-error numerators (MSE numerators)
        dr = (feat_ref[OFF_PR:OFF_PR + 9 * K, :]
              - feat_ref[OFF_GR:OFF_GR + 9 * K, :])
        sp = jnp.sum(dr * dr, axis=0, keepdims=True)          # (1, TB)
        db = feat_ref[OFF_PB:OFF_PB + 16, :] - feat_ref[OFF_GB:OFF_GB + 16, :]
        sb = jnp.sum(db * db, axis=0, keepdims=True)          # (1, TB)

        # only split 0 reports the feat-path rows; the wrapper sums over the
        # split axis, so other splits must contribute zeros here.
        scale = (c == 0).astype(f32)
        zero = jnp.zeros_like(s2d)
        sums_ref[...] = scale * jnp.concatenate(
            [s2d, s3d, sp, sb, zero, zero, zero, zero], axis=0)  # (8, TB)

    # ---------------- vertex path: every chunk --------------------------------
    d = jnp.abs(pv_ref[...].astype(f32) - gv_ref[...].astype(f32))
    if need_mask:
        g = c * chunks_per_split + j                      # global chunk index
        col = (lax.broadcasted_iota(jnp.int32, (1, chunk_lanes), 1)
               + g * chunk_lanes)
        d = jnp.where(col < vd, d, 0.0)
    # TODO(synk): on v7x, if vld/VALU (not DMA) saturates after the bf16 change,
    # move this lane reduction to the MXU: jnp.dot(d, ones((chunk_lanes, 128))).
    vcol_ref[...] += jnp.sum(d, axis=1, keepdims=True)    # (NV_ROWS, 1) f32

    # ---------------- finalize: fold vertex sums into a lane-dense row --------
    @pl.when(j == chunks_per_split - 1)
    def _finalize():
        tb = sums_ref.shape[1]
        nvr = vcol_ref.shape[0]
        col = vcol_ref[...]
        if nvr < tb:
            col = jnp.concatenate([col, jnp.zeros((tb - nvr, 1), f32)], axis=0)
        # (TB,1) column -> (1,TB) row: lane-broadcast + square XLU transpose
        vrow = jnp.transpose(jnp.broadcast_to(col, (tb, tb)))[0:1, :]
        cur = sums_ref[...]
        sums_ref[...] = jnp.concatenate(
            [cur[0:4, :], vrow, jnp.zeros((3, tb), f32)], axis=0)


# ----------------------------------------------------------------------------
# Wrapper around pallas_call
# ----------------------------------------------------------------------------
def smpl_loss_partial_sums(pred_joints, gt_kp2d, gt_kp3d, pred_vertices,
                           gt_vertices, pred_rotmat_flat, gt_rotmat_flat,
                           pred_betas, gt_betas, translation,
                           img_w, img_h, focal_length=FOCAL_LENGTH,
                           vertex_dtype=jnp.bfloat16):
    """Per-detection partial sums: (s2d, s3d, s_vert, s_pose, s_betas), (N,)."""
    N, K, _ = pred_joints.shape
    assert K == NUM_JOINTS, "kernel row layout assumes 24 SMPL joints"
    V = pred_vertices.shape[1]
    VD = V * 3

    N_pad = _round_up(max(N, 1), TB)
    num_blocks = N_pad // TB
    # vertex sample-axis rows per block: full extent when a single block (no
    # over-sized blocks for small N), otherwise 128 (ragged last block ok).
    nv_rows = TB if num_blocks > 1 else N

    # ---- vertex chunking (innermost "arbitrary" grid axis) ------------------
    if VD <= VC_TARGET:
        VC, num_chunks = VD, 1                     # single full-extent chunk
    else:
        nc = _cdiv(VD, VC_TARGET)
        if num_blocks == 1:
            nc = _round_up(nc, 2)                  # even -> 2-way core split
        VC = _round_up(_cdiv(VD, nc), 128)
        num_chunks = _cdiv(VD, VC)
    num_splits = 2 if (num_blocks == 1 and num_chunks >= 2
                       and num_chunks % 2 == 0) else 1
    cps = num_chunks // num_splits
    need_mask = (VC * num_chunks != VD)

    f32 = jnp.float32

    def _comp_major(x):  # (N, K, C) -> (C*K, N): rows grouped by component
        return jnp.transpose(x.astype(f32), (2, 1, 0)).reshape(-1, x.shape[0])

    feat = jnp.concatenate([
        _comp_major(pred_joints),                                 # 72 rows
        _comp_major(gt_kp2d),                                     # 72 rows
        _comp_major(gt_kp3d),                                     # 96 rows
        pred_rotmat_flat.astype(f32).reshape(N, 9 * K).T,         # 216 rows
        gt_rotmat_flat.astype(f32).reshape(N, 9 * K).T,           # 216 rows
        jnp.pad(pred_betas.astype(f32), ((0, 0), (0, 6))).T,      # 16 rows
        jnp.pad(gt_betas.astype(f32), ((0, 0), (0, 6))).T,        # 16 rows
        jnp.pad(translation.astype(f32), ((0, 0), (0, 5))).T,     # 8 rows
    ], axis=0)                                                    # (712, N)
    feat = jnp.pad(feat, ((0, 0), (0, N_pad - N)))
    # one contiguous (FEAT_ROWS, 128) slab per sample block -> single DMA/step
    feat = feat.reshape(FEAT_ROWS, num_blocks, TB).transpose(1, 0, 2)

    # vertices: natural (N, V*3) view, streamed as bf16; NO host-side padding
    # (ragged edges handled in-kernel / sliced off).  Upstream producers can
    # hand these in as bf16 directly to skip the cast copy entirely.
    pv = pred_vertices.reshape(N, VD)
    gv = gt_vertices.reshape(N, VD)
    if pv.dtype != vertex_dtype:
        pv = pv.astype(vertex_dtype)
    if gv.dtype != vertex_dtype:
        gv = gv.astype(vertex_dtype)

    kernel = functools.partial(
        _smpl_loss_kernel,
        img_w=float(img_w), img_h=float(img_h),
        focal_length=float(focal_length),
        vd=VD, chunks_per_split=cps, need_mask=need_mask)

    sums = pl.pallas_call(
        kernel,
        out_shape=jax.ShapeDtypeStruct((num_splits, 8, N_pad), jnp.float32),
        grid_spec=pltpu.PrefetchScalarGridSpec(
            num_scalar_prefetch=0,
            grid=(num_splits, num_blocks, cps),
            in_specs=[
                pl.BlockSpec((None, FEAT_ROWS, TB), lambda c, i, j: (i, 0, 0)),
                pl.BlockSpec((nv_rows, VC), lambda c, i, j: (i, c * cps + j)),
                pl.BlockSpec((nv_rows, VC), lambda c, i, j: (i, c * cps + j)),
            ],
            out_specs=pl.BlockSpec((None, 8, TB), lambda c, i, j: (c, 0, i)),
            scratch_shapes=[pltpu.VMEM((nv_rows, 1), jnp.float32)],
        ),
        compiler_params=pltpu.CompilerParams(
            dimension_semantics=("parallel", "parallel", "arbitrary")),
    )(feat, pv, gv)

    sums = jnp.sum(sums, axis=0)          # reduce the core-split axis
    s2d = sums[0, :N]
    s3d = sums[1, :N]
    sp = sums[2, :N]
    sb = sums[3, :N]
    sv = sums[4, :N]
    return s2d, s3d, sv, sp, sb


# ----------------------------------------------------------------------------
# Glue: batch_rodrigues (gt pose axis-angle -> rotmats), masks, normalisation
# ----------------------------------------------------------------------------
def quat2mat(quat):
    norm_quat = quat / jnp.linalg.norm(quat, axis=1, keepdims=True)
    w, x, y, z = (norm_quat[:, 0], norm_quat[:, 1],
                  norm_quat[:, 2], norm_quat[:, 3])
    w2, x2, y2, z2 = w * w, x * x, y * y, z * z
    wx, wy, wz = w * x, w * y, w * z
    xy, xz, yz = x * y, x * z, y * z
    rot = jnp.stack([
        w2 + x2 - y2 - z2, 2 * xy - 2 * wz, 2 * wy + 2 * xz,
        2 * wz + 2 * xy, w2 - x2 + y2 - z2, 2 * yz - 2 * wx,
        2 * xz - 2 * wy, 2 * wx + 2 * yz, w2 - x2 - y2 + z2], axis=1)
    return rot.reshape(quat.shape[0], 3, 3)


def batch_rodrigues(theta):
    l1norm = jnp.linalg.norm(theta + 1e-8, axis=1)
    angle = l1norm[:, None]
    normalized = theta / angle
    half = angle * 0.5
    quat = jnp.concatenate([jnp.cos(half), jnp.sin(half) * normalized], axis=1)
    return quat2mat(quat)


def smpl_loss_forward(pred, target, bboxes_confidence,
                      focal_length=FOCAL_LENGTH):
    pred_rotmat = pred['pred_rotmat']            # (N, 24, 3, 3)
    pred_camera = pred['pred_camera']            # (N, 3)
    pred_joints = pred['pred_joints']            # (N, 24, 3)
    pred_vertices = pred['pred_vertices']        # (N, V, 3)
    pred_betas = pred['pred_betas']              # (N, 10)

    gt_pose = target['gt_rotmat']                # (N, 72) axis-angle (as torch)
    gt_shape = target['gt_shape']                # (N, 10)
    gt_keypoints_2d = target['gt_keypoints_2d']  # (N, 24, 3)
    gt_keypoints_3d = target['gt_keypoints_3d']  # (N, 24, 4)
    has_smpl = target['has_smpl']                # (N,)
    gt_vertices = target['gt_vertices']          # (N, V, 3)
    pred_bboxes = target['pred_bboxes']          # (N, 4)
    raw_images = target['raw_images']            # (B, 3, H, W)
    idxs_in_batch = target['idxs_in_batch']      # (N, 1)
    pose_idx = target['pose_idx']                # (N, 1)

    N, K, _ = pred_joints.shape
    V = pred_vertices.shape[1]

    # pad_size=False default -> img_size from raw_images.shape[:-3:-1] == (W, H)
    W, H = raw_images.shape[-1], raw_images.shape[-2]
    img_size = jnp.broadcast_to(jnp.array([W, H], jnp.float32), (N, 2))

    center_pts = (pred_bboxes[..., :2] + pred_bboxes[..., 2:4]) / 2.0
    w_abs = jnp.abs(pred_bboxes[..., 0] - pred_bboxes[..., 2])
    h_abs = jnp.abs(pred_bboxes[..., 1] - pred_bboxes[..., 3])
    bboxes_size = jnp.maximum(w_abs, h_abs)
    valid_boxes = (w_abs > 5) & (h_abs > 5)
    depth = 2.0 * focal_length / (1e-6 + pred_camera[..., 0] * bboxes_size)
    trans_xy = depth[:, None] * (center_pts
                                 + pred_camera[:, 1:] * bboxes_size[:, None]
                                 - img_size / 2.0) / focal_length
    translation = jnp.concatenate([trans_xy, depth[:, None]], axis=1)  # (N, 3)

    gt_rotmat = batch_rodrigues(gt_pose.reshape(-1, 3)).reshape(N, K * 9)
    pred_rotmat_flat = pred_rotmat.reshape(N, K * 9)

    s2d, s3d, sv, sp, sb = smpl_loss_partial_sums(
        pred_joints, gt_keypoints_2d, gt_keypoints_3d,
        pred_vertices, gt_vertices, pred_rotmat_flat, gt_rotmat,
        pred_betas, gt_shape, translation, W, H, focal_length)

    valid = valid_boxes.astype(jnp.float32)
    n_valid = jnp.sum(valid)

    loss_kpt = jnp.sum(valid * s2d) / jnp.maximum(n_valid * K * 2, 1.0)
    loss_kpt = jnp.where(n_valid > 0, loss_kpt, 0.0)
    any_3d = jnp.sum(valid[:, None, None]
                     * jnp.abs(gt_keypoints_3d[:, :, :3])) > 0
    loss_kpt3d = jnp.sum(valid * s3d) / jnp.maximum(n_valid * K * 3, 1.0)
    loss_kpt3d = jnp.where((n_valid > 0) & any_3d, loss_kpt3d, 0.0)

    mask_sh = valid * (has_smpl == 1).astype(jnp.float32)
    n_sh = jnp.sum(mask_sh)
    loss_shape = jnp.where(
        n_sh > 0, jnp.sum(mask_sh * sv) / jnp.maximum(n_sh * V * 3, 1.0), 0.0)
    loss_pose = jnp.where(
        n_sh > 0, jnp.sum(mask_sh * sp) / jnp.maximum(n_sh * K * 9, 1.0), 0.0)
    loss_betas = jnp.where(
        n_sh > 0, jnp.sum(mask_sh * sb) / jnp.maximum(n_sh * 10, 1.0), 0.0)

    # un-normalised projected 2D keypoints (passthrough only, tiny)
    pts = pred_joints + translation[:, None, :]
    pred_kp2d_orig = (focal_length * pts[:, :, :2] / pts[:, :, 2:3]
                      + (img_size / 2.0)[:, None, :])

    loss_dict = {
        'loss_keypoints_smpl': loss_kpt * 4.0,
        'loss_keypoints_3d_smpl': loss_kpt3d,
        'loss_shape_smpl': loss_shape,
        'loss_regr_pose': loss_pose,
        'loss_regr_betas': loss_betas * 0.01,
        'loss_sdf': jnp.float32(0.0),  # TODO(synk): SDFLoss not translatable
        'img$raw_images': raw_images,
        'img$idxs_in_batch': idxs_in_batch,
        'img$pose_idx': pose_idx,
        'img$pred_vertices': pred_vertices,
        'img$translation': translation,
        'img$error_rank': -bboxes_confidence,
        'img$pred_bboxes': pred_bboxes,
        'img$pred_keypoints_2d_smpl': pred_kp2d_orig[:, -24:, :],
        'img$gt_keypoints_2d': gt_keypoints_2d,
    }
    return loss_dict


# ----------------------------------------------------------------------------
# Pure-jnp (f32) reference of the loss terms, for checking the kernel
# ----------------------------------------------------------------------------
def _reference_losses(pred, target, focal_length=FOCAL_LENGTH):
    pj = pred['pred_joints']; pv = pred['pred_vertices']
    pr = pred['pred_rotmat']; pb = pred['pred_betas']; pc = pred['pred_camera']
    g2 = target['gt_keypoints_2d']; g3 = target['gt_keypoints_3d']
    gvv = target['gt_vertices']; gp = target['gt_rotmat']; gs = target['gt_shape']
    hs = target['has_smpl']; bb = target['pred_bboxes']; raw = target['raw_images']
    N, K, _ = pj.shape
    V = pv.shape[1]
    W, H = raw.shape[-1], raw.shape[-2]
    img_size = jnp.array([W, H], jnp.float32)

    center = (bb[..., :2] + bb[..., 2:4]) / 2.0
    w_abs = jnp.abs(bb[..., 0] - bb[..., 2])
    h_abs = jnp.abs(bb[..., 1] - bb[..., 3])
    size = jnp.maximum(w_abs, h_abs)
    valid = ((w_abs > 5) & (h_abs > 5)).astype(jnp.float32)
    depth = 2.0 * focal_length / (1e-6 + pc[..., 0] * size)
    t_xy = depth[:, None] * (center + pc[:, 1:] * size[:, None]
                             - img_size / 2.0) / focal_length
    trans = jnp.concatenate([t_xy, depth[:, None]], axis=1)
    n_valid = valid.sum()

    pts = pj + trans[:, None, :]
    proj = focal_length * pts[..., :2] / pts[..., 2:3] + img_size / 2.0
    l2 = g2[..., 2:3] * jnp.abs(proj / img_size - g2[..., :2] / img_size)
    loss_kpt = (valid[:, None, None] * l2).sum() / (n_valid * K * 2)

    gt3 = g3[..., :3]
    conf3 = g3[..., 3:4]
    gt_pelvis = (gt3[:, 2] + gt3[:, 3]) / 2.0
    pr_pelvis = (pj[:, 2] + pj[:, 3]) / 2.0
    l3 = conf3 * jnp.abs((pj - pr_pelvis[:, None]) - (gt3 - gt_pelvis[:, None]))
    loss_kpt3d = (valid[:, None, None] * l3).sum() / (n_valid * K * 3)

    msk = valid * (hs == 1).astype(jnp.float32)
    n_sh = msk.sum()
    loss_shape = (msk[:, None, None] * jnp.abs(pv - gvv)).sum() / (n_sh * V * 3)
    gt_rm = batch_rodrigues(gp.reshape(-1, 3)).reshape(N, K, 3, 3)
    loss_pose = (msk[:, None, None, None] * (pr - gt_rm) ** 2).sum() / (n_sh * K * 9)
    loss_betas = (msk[:, None] * (pb - gs) ** 2).sum() / (n_sh * 10)

    return {'loss_keypoints_smpl': loss_kpt * 4.0,
            'loss_keypoints_3d_smpl': loss_kpt3d,
            'loss_shape_smpl': loss_shape,
            'loss_regr_pose': loss_pose,
            'loss_regr_betas': loss_betas * 0.01}


# ----------------------------------------------------------------------------
# Synthetic example
# ----------------------------------------------------------------------------
if __name__ == "__main__":
    key = jax.random.PRNGKey(0)
    # V=1500 -> V*3=4500 vertex lanes: exercises the multi-chunk path, the
    # ragged-tail lane mask AND the 2-way core split (grid = (2, 1, 2)).
    N, K, V = 8, 24, 1500
    B, H, W = 2, 64, 64
    ks = jax.random.split(key, 20)

    # predictions
    pred_rotmat = batch_rodrigues(
        0.3 * jax.random.normal(ks[0], (N * K, 3))).reshape(N, K, 3, 3)
    pred_camera = jnp.concatenate(
        [jax.random.uniform(ks[1], (N, 1), minval=0.6, maxval=1.4),
         0.05 * jax.random.normal(ks[2], (N, 2))], axis=1)
    pred_joints = 0.3 * jax.random.normal(ks[3], (N, K, 3))
    pred_vertices = 0.3 * jax.random.normal(ks[4], (N, V, 3))
    pred_betas = 0.5 * jax.random.normal(ks[5], (N, 10))
    pred = dict(pred_rotmat=pred_rotmat, pred_camera=pred_camera,
                pred_joints=pred_joints, pred_vertices=pred_vertices,
                pred_betas=pred_betas)

    # targets
    x1 = jax.random.uniform(ks[6], (N,), minval=2.0, maxval=20.0)
    y1 = jax.random.uniform(ks[7], (N,), minval=2.0, maxval=20.0)
    x2 = x1 + jax.random.uniform(ks[8], (N,), minval=10.0, maxval=40.0)
    y2 = y1 + jax.random.uniform(ks[9], (N,), minval=10.0, maxval=40.0)
    pred_bboxes = jnp.stack([x1, y1, x2, y2], axis=1)

    target = dict(
        gt_rotmat=0.3 * jax.random.normal(ks[10], (N, K * 3)),  # axis-angle pose
        gt_shape=0.5 * jax.random.normal(ks[11], (N, 10)),
        gt_camera=jnp.zeros((N, 3), jnp.float32),
        gt_keypoints_2d=jnp.concatenate(
            [jax.random.uniform(ks[12], (N, K, 2), minval=0.0, maxval=64.0),
             (jax.random.uniform(ks[13], (N, K, 1)) > 0.3).astype(jnp.float32)],
            axis=-1),
        gt_keypoints_3d=jnp.concatenate(
            [0.3 * jax.random.normal(ks[14], (N, K, 3)),
             jnp.ones((N, K, 1), jnp.float32)], axis=-1),
        has_smpl=jnp.array([1, 1, 0, 1, 1, 1, 0, 1], jnp.float32),
        gt_vertices=0.3 * jax.random.normal(ks[15], (N, V, 3)),
        pred_bboxes=pred_bboxes,
        raw_images=jax.random.uniform(ks[16], (B, 3, H, W)),
        idxs_in_batch=jnp.array([[0], [0], [0], [0], [1], [1], [1], [1]],
                                jnp.float32),
        pose_idx=jnp.array([[0], [1], [2], [3], [0], [1], [2], [3]],
                           jnp.float32),
    )
    bboxes_confidence = jax.random.uniform(ks[17], (N,))

    loss_dict = smpl_loss_forward(pred, target, bboxes_confidence)
    jax.block_until_ready(loss_dict)

    ref = _reference_losses(pred, target)
    # shape loss gets a looser tolerance (vertices are streamed as bf16)
    tol = {'loss_keypoints_smpl': 2e-3, 'loss_keypoints_3d_smpl': 2e-3,
           'loss_shape_smpl': 3e-2, 'loss_regr_pose': 2e-3,
           'loss_regr_betas': 2e-3}
    for name, rtol in tol.items():
        got = float(loss_dict[name])
        want = float(ref[name])
        assert got == got and abs(got) != float('inf'), f"non-finite {name}: {got}"
        assert abs(got - want) <= rtol * max(abs(want), 1e-6) + 1e-6, \
            f"{name}: kernel={got} reference={want}"
    print("KERNEL_OK")
</pallas_src>

<mosaic_0001>
module attributes {stable_mosaic.version = 11 : i64} {
  func.func @_smpl_loss_kernel(%arg0: i32, %arg1: i32, %arg2: i32, %arg3: memref<1x712x128xf32, #tpu.memory_space<vmem>>, %arg4: memref<8x1152xbf16, #tpu.memory_space<vmem>>, %arg5: memref<8x1152xbf16, #tpu.memory_space<vmem>>, %arg6: memref<1x8x128xf32, #tpu.memory_space<vmem>>, %arg7: memref<8x1xf32, #tpu.memory_space<vmem>>) attributes {dimension_semantics = [#tpu.dimension_semantics<parallel>, #tpu.dimension_semantics<parallel>, #tpu.dimension_semantics<arbitrary>], iteration_bounds = array<i64: 2, 1, 2>, scalar_prefetch = 0 : i64, scratch_operands = 1 : i64, tpu.core_type = #tpu.core_type<tc>, window_params = [{transform_indices = @transform_0, window_bounds = array<i64: 1, 712, 128>}, {transform_indices = @transform_1, window_bounds = array<i64: 8, 1152>}, {transform_indices = @transform_2, window_bounds = array<i64: 8, 1152>}, {transform_indices = @transform_3, window_bounds = array<i64: 1, 8, 128>}]} {
    %c0_i32 = arith.constant 0 : i32
    %0 = arith.cmpi eq, %arg2, %c0_i32 : i32
    %1 = arith.extui %0 : i1 to i32
    %c0_i32_0 = arith.constant 0 : i32
    %2 = arith.cmpi ne, %1, %c0_i32_0 : i32
    scf.if %2 {
      %cst_10 = arith.constant 0.000000e+00 : f32
      %29 = vector.broadcast %cst_10 : f32 to vector<8x1xf32>
      %c0_11 = arith.constant 0 : index
      %c0_12 = arith.constant 0 : index
      %30 = vector.load %arg7[%c0_11, %c0_12] : memref<8x1xf32, #tpu.memory_space<vmem>>, vector<8x1xf32>
      tpu.vector_store %arg7[%c0_11, %c0_12], %29 {strides = array<i32>} : memref<8x1xf32, #tpu.memory_space<vmem>>, vector<8x1xf32>,
      %c0_13 = arith.constant 0 : index
      %c0_14 = arith.constant 0 : index
      %c0_15 = arith.constant 0 : index
      %31 = vector.load %arg3[%c0_13, %c0_14, %c0_15] : memref<1x712x128xf32, #tpu.memory_space<vmem>>, vector<1x24x128xf32>
      %32 = vector.shape_cast %31 : vector<1x24x128xf32> to vector<24x128xf32>
      %c0_16 = arith.constant 0 : index
      %c24 = arith.constant 24 : index
      %c0_17 = arith.constant 0 : index
      %33 = vector.load %arg3[%c0_16, %c24, %c0_17] : memref<1x712x128xf32, #tpu.memory_space<vmem>>, vector<1x24x128xf32>
      %34 = vector.shape_cast %33 : vector<1x24x128xf32> to vector<24x128xf32>
      %c0_18 = arith.constant 0 : index
      %c48 = arith.constant 48 : index
      %c0_19 = arith.constant 0 : index
      %35 = vector.load %arg3[%c0_18, %c48, %c0_19] : memref<1x712x128xf32, #tpu.memory_space<vmem>>, vector<1x24x128xf32>
      %36 = vector.shape_cast %35 : vector<1x24x128xf32> to vector<24x128xf32>
      %c0_20 = arith.constant 0 : index
      %c704 = arith.constant 704 : index
      %c0_21 = arith.constant 0 : index
      %37 = vector.load %arg3[%c0_20, %c704, %c0_21] : memref<1x712x128xf32, #tpu.memory_space<vmem>>, vector<1x8x128xf32>
      %38 = vector.shape_cast %37 : vector<1x8x128xf32> to vector<8x128xf32>
      %39 = vector.extract_strided_slice %38 {offsets = [0, 0], sizes = [1, 128], strides = [1, 1]} : vector<8x128xf32> to vector<1x128xf32>
      %40 = vector.extract_strided_slice %38 {offsets = [1, 0], sizes = [1, 128], strides = [1, 1]} : vector<8x128xf32> to vector<1x128xf32>
      %41 = vector.extract_strided_slice %38 {offsets = [2, 0], sizes = [1, 128], strides = [1, 1]} : vector<8x128xf32> to vector<1x128xf32>
      %42 = vector.broadcast %41 : vector<1x128xf32> to vector<24x128xf32>
      %43 = arith.addf %36, %42 : vector<24x128xf32>
      %44 = tpu.reciprocal %43 : vector<24x128xf32> -> vector<24x128xf32>
      %45 = vector.broadcast %39 : vector<1x128xf32> to vector<24x128xf32>
      %46 = arith.addf %32, %45 : vector<24x128xf32>
      %cst_22 = arith.constant 1.000000e+03 : f32
      %47 = vector.broadcast %cst_22 : f32 to vector<24x128xf32>
      %48 = arith.mulf %47, %46 : vector<24x128xf32>
      %49 = arith.mulf %48, %44 : vector<24x128xf32>
      %cst_23 = arith.constant 1.562500e-02 : f32
      %50 = vector.broadcast %cst_23 : f32 to vector<24x128xf32>
      %51 = arith.mulf %49, %50 : vector<24x128xf32>
      %cst_24 = arith.constant 5.000000e-01 : f32
      %52 = vector.broadcast %cst_24 : f32 to vector<24x128xf32>
      %53 = arith.addf %51, %52 : vector<24x128xf32>
      %54 = vector.broadcast %40 : vector<1x128xf32> to vector<24x128xf32>
      %55 = arith.addf %34, %54 : vector<24x128xf32>
      %cst_25 = arith.constant 1.000000e+03 : f32
      %56 = vector.broadcast %cst_25 : f32 to vector<24x128xf32>
      %57 = arith.mulf %56, %55 : vector<24x128xf32>
      %58 = arith.mulf %57, %44 : vector<24x128xf32>
      %cst_26 = arith.constant 1.562500e-02 : f32
      %59 = vector.broadcast %cst_26 : f32 to vector<24x128xf32>
      %60 = arith.mulf %58, %59 : vector<24x128xf32>
      %cst_27 = arith.constant 5.000000e-01 : f32
      %61 = vector.broadcast %cst_27 : f32 to vector<24x128xf32>
      %62 = arith.addf %60, %61 : vector<24x128xf32>
      %c0_28 = arith.constant 0 : index
      %c72 = arith.constant 72 : index
      %c0_29 = arith.constant 0 : index
      %63 = vector.load %arg3[%c0_28, %c72, %c0_29] : memref<1x712x128xf32, #tpu.memory_space<vmem>>, vector<1x24x128xf32>
      %64 = vector.shape_cast %63 : vector<1x24x128xf32> to vector<24x128xf32>
      %cst_30 = arith.constant 1.562500e-02 : f32
      %65 = vector.broadcast %cst_30 : f32 to vector<24x128xf32>
      %66 = arith.mulf %64, %65 : vector<24x128xf32>
      %c0_31 = arith.constant 0 : index
      %c96 = arith.constant 96 : index
      %c0_32 = arith.constant 0 : index
      %67 = vector.load %arg3[%c0_31, %c96, %c0_32] : memref<1x712x128xf32, #tpu.memory_space<vmem>>, vector<1x24x128xf32>
      %68 = vector.shape_cast %67 : vector<1x24x128xf32> to vector<24x128xf32>
      %cst_33 = arith.constant 1.562500e-02 : f32
      %69 = vector.broadcast %cst_33 : f32 to vector<24x128xf32>
      %70 = arith.mulf %68, %69 : vector<24x128xf32>
      %c0_34 = arith.constant 0 : index
      %c120 = arith.constant 120 : index
      %c0_35 = arith.constant 0 : index
      %71 = vector.load %arg3[%c0_34, %c120, %c0_35] : memref<1x712x128xf32, #tpu.memory_space<vmem>>, vector<1x24x128xf32>
      %72 = vector.shape_cast %71 : vector<1x24x128xf32> to vector<24x128xf32>
      %73 = arith.subf %53, %66 : vector<24x128xf32>
      %74 = math.absf %73 : vector<24x128xf32>
      %75 = arith.subf %62, %70 : vector<24x128xf32>
      %76 = math.absf %75 : vector<24x128xf32>
      %77 = arith.addf %74, %76 : vector<24x128xf32>
      %78 = arith.mulf %72, %77 : vector<24x128xf32>
      %cst_36 = arith.constant dense<0.000000e+00> : vector<128xf32>
      %79 = vector.multi_reduction <add>, %78, %cst_36 [0] : vector<24x128xf32> to vector<128xf32>
      %80 = vector.shape_cast %79 : vector<128xf32> to vector<1x128xf32>
      %c0_37 = arith.constant 0 : index
      %c144 = arith.constant 144 : index
      %c0_38 = arith.constant 0 : index
      %81 = vector.load %arg3[%c0_37, %c144, %c0_38] : memref<1x712x128xf32, #tpu.memory_space<vmem>>, vector<1x24x128xf32>
      %82 = vector.shape_cast %81 : vector<1x24x128xf32> to vector<24x128xf32>
      %c0_39 = arith.constant 0 : index
      %c168 = arith.constant 168 : index
      %c0_40 = arith.constant 0 : index
      %83 = vector.load %arg3[%c0_39, %c168, %c0_40] : memref<1x712x128xf32, #tpu.memory_space<vmem>>, vector<1x24x128xf32>
      %84 = vector.shape_cast %83 : vector<1x24x128xf32> to vector<24x128xf32>
      %c0_41 = arith.constant 0 : index
      %c192 = arith.constant 192 : index
      %c0_42 = arith.constant 0 : index
      %85 = vector.load %arg3[%c0_41, %c192, %c0_42] : memref<1x712x128xf32, #tpu.memory_space<vmem>>, vector<1x24x128xf32>
      %86 = vector.shape_cast %85 : vector<1x24x128xf32> to vector<24x128xf32>
      %c0_43 = arith.constant 0 : index
      %c216 = arith.constant 216 : index
      %c0_44 = arith.constant 0 : index
      %87 = vector.load %arg3[%c0_43, %c216, %c0_44] : memref<1x712x128xf32, #tpu.memory_space<vmem>>, vector<1x24x128xf32>
      %88 = vector.shape_cast %87 : vector<1x24x128xf32> to vector<24x128xf32>
      %89 = vector.extract_strided_slice %82 {offsets = [2, 0], sizes = [1, 128], strides = [1, 1]} : vector<24x128xf32> to vector<1x128xf32>
      %90 = vector.extract_strided_slice %82 {offsets = [3, 0], sizes = [1, 128], strides = [1, 1]} : vector<24x128xf32> to vector<1x128xf32>
      %91 = arith.addf %89, %90 : vector<1x128xf32>
      %cst_45 = arith.constant 5.000000e-01 : f32
      %92 = vector.broadcast %cst_45 : f32 to vector<1x128xf32>
      %93 = arith.mulf %91, %92 : vector<1x128xf32>
      %94 = vector.extract_strided_slice %84 {offsets = [2, 0], sizes = [1, 128], strides = [1, 1]} : vector<24x128xf32> to vector<1x128xf32>
      %95 = vector.extract_strided_slice %84 {offsets = [3, 0], sizes = [1, 128], strides = [1, 1]} : vector<24x128xf32> to vector<1x128xf32>
      %96 = arith.addf %94, %95 : vector<1x128xf32>
      %cst_46 = arith.constant 5.000000e-01 : f32
      %97 = vector.broadcast %cst_46 : f32 to vector<1x128xf32>
      %98 = arith.mulf %96, %97 : vector<1x128xf32>
      %99 = vector.extract_strided_slice %86 {offsets = [2, 0], sizes = [1, 128], strides = [1, 1]} : vector<24x128xf32> to vector<1x128xf32>
      %100 = vector.extract_strided_slice %86 {offsets = [3, 0], sizes = [1, 128], strides = [1, 1]} : vector<24x128xf32> to vector<1x128xf32>
      %101 = arith.addf %99, %100 : vector<1x128xf32>
      %cst_47 = arith.constant 5.000000e-01 : f32
      %102 = vector.broadcast %cst_47 : f32 to vector<1x128xf32>
      %103 = arith.mulf %101, %102 : vector<1x128xf32>
      %104 = vector.extract_strided_slice %32 {offsets = [2, 0], sizes = [1, 128], strides = [1, 1]} : vector<24x128xf32> to vector<1x128xf32>
      %105 = vector.extract_strided_slice %32 {offsets = [3, 0], sizes = [1, 128], strides = [1, 1]} : vector<24x128xf32> to vector<1x128xf32>
      %106 = arith.addf %104, %105 : vector<1x128xf32>
      %cst_48 = arith.constant 5.000000e-01 : f32
      %107 = vector.broadcast %cst_48 : f32 to vector<1x128xf32>
      %108 = arith.mulf %106, %107 : vector<1x128xf32>
      %109 = vector.extract_strided_slice %34 {offsets = [2, 0], sizes = [1, 128], strides = [1, 1]} : vector<24x128xf32> to vector<1x128xf32>
      %110 = vector.extract_strided_slice %34 {offsets = [3, 0], sizes = [1, 128], strides = [1, 1]} : vector<24x128xf32> to vector<1x128xf32>
      %111 = arith.addf %109, %110 : vector<1x128xf32>
      %cst_49 = arith.constant 5.000000e-01 : f32
      %112 = vector.broadcast %cst_49 : f32 to vector<1x128xf32>
      %113 = arith.mulf %111, %112 : vector<1x128xf32>
      %114 = vector.extract_strided_slice %36 {offsets = [2, 0], sizes = [1, 128], strides = [1, 1]} : vector<24x128xf32> to vector<1x128xf32>
      %115 = vector.extract_strided_slice %36 {offsets = [3, 0], sizes = [1, 128], strides = [1, 1]} : vector<24x128xf32> to vector<1x128xf32>
      %116 = arith.addf %114, %115 : vector<1x128xf32>
      %cst_50 = arith.constant 5.000000e-01 : f32
      %117 = vector.broadcast %cst_50 : f32 to vector<1x128xf32>
      %118 = arith.mulf %116, %117 : vector<1x128xf32>
      %119 = vector.broadcast %108 : vector<1x128xf32> to vector<24x128xf32>
      %120 = arith.subf %32, %119 : vector<24x128xf32>
      %121 = vector.broadcast %93 : vector<1x128xf32> to vector<24x128xf32>
      %122 = arith.subf %82, %121 : vector<24x128xf32>
      %123 = arith.subf %120, %122 : vector<24x128xf32>
      %124 = vector.broadcast %113 : vector<1x128xf32> to vector<24x128xf32>
      %125 = arith.subf %34, %124 : vector<24x128xf32>
      %126 = vector.broadcast %98 : vector<1x128xf32> to vector<24x128xf32>
      %127 = arith.subf %84, %126 : vector<24x128xf32>
      %128 = arith.subf %125, %127 : vector<24x128xf32>
      %129 = vector.broadcast %118 : vector<1x128xf32> to vector<24x128xf32>
      %130 = arith.subf %36, %129 : vector<24x128xf32>
      %131 = vector.broadcast %103 : vector<1x128xf32> to vector<24x128xf32>
      %132 = arith.subf %86, %131 : vector<24x128xf32>
      %133 = arith.subf %130, %132 : vector<24x128xf32>
      %134 = math.absf %123 : vector<24x128xf32>
      %135 = math.absf %128 : vector<24x128xf32>
      %136 = arith.addf %134, %135 : vector<24x128xf32>
      %137 = math.absf %133 : vector<24x128xf32>
      %138 = arith.addf %136, %137 : vector<24x128xf32>
      %139 = arith.mulf %88, %138 : vector<24x128xf32>
      %cst_51 = arith.constant dense<0.000000e+00> : vector<128xf32>
      %140 = vector.multi_reduction <add>, %139, %cst_51 [0] : vector<24x128xf32> to vector<128xf32>
      %141 = vector.shape_cast %140 : vector<128xf32> to vector<1x128xf32>
      %c0_52 = arith.constant 0 : index
      %c240 = arith.constant 240 : index
      %c0_53 = arith.constant 0 : index
      %142 = vector.load %arg3[%c0_52, %c240, %c0_53] : memref<1x712x128xf32, #tpu.memory_space<vmem>>, vector<1x216x128xf32>
      %143 = vector.shape_cast %142 : vector<1x216x128xf32> to vector<216x128xf32>
      %c0_54 = arith.constant 0 : index
      %c456 = arith.constant 456 : index
      %c0_55 = arith.constant 0 : index
      %144 = vector.load %arg3[%c0_54, %c456, %c0_55] : memref<1x712x128xf32, #tpu.memory_space<vmem>>, vector<1x216x128xf32>
      %145 = vector.shape_cast %144 : vector<1x216x128xf32> to vector<216x128xf32>
      %146 = arith.subf %143, %145 : vector<216x128xf32>
      %147 = arith.mulf %146, %146 : vector<216x128xf32>
      %cst_56 = arith.constant dense<0.000000e+00> : vector<128xf32>
      %148 = vector.multi_reduction <add>, %147, %cst_56 [0] : vector<216x128xf32> to vector<128xf32>
      %149 = vector.shape_cast %148 : vector<128xf32> to vector<1x128xf32>
      %c0_57 = arith.constant 0 : index
      %c672 = arith.constant 672 : index
      %c0_58 = arith.constant 0 : index
      %150 = vector.load %arg3[%c0_57, %c672, %c0_58] : memref<1x712x128xf32, #tpu.memory_space<vmem>>, vector<1x16x128xf32>
      %151 = vector.shape_cast %150 : vector<1x16x128xf32> to vector<16x128xf32>
      %c0_59 = arith.constant 0 : index
      %c688 = arith.constant 688 : index
      %c0_60 = arith.constant 0 : index
      %152 = vector.load %arg3[%c0_59, %c688, %c0_60] : memref<1x712x128xf32, #tpu.memory_space<vmem>>, vector<1x16x128xf32>
      %153 = vector.shape_cast %152 : vector<1x16x128xf32> to vector<16x128xf32>
      %154 = arith.subf %151, %153 : vector<16x128xf32>
      %155 = arith.mulf %154, %154 : vector<16x128xf32>
      %cst_61 = arith.constant dense<0.000000e+00> : vector<128xf32>
      %156 = vector.multi_reduction <add>, %155, %cst_61 [0] : vector<16x128xf32> to vector<128xf32>
      %157 = vector.shape_cast %156 : vector<128xf32> to vector<1x128xf32>
      %c0_i32_62 = arith.constant 0 : i32
      %158 = arith.cmpi eq, %arg0, %c0_i32_62 : i32
      %159 = arith.extui %158 : i1 to i32
      %160 = arith.sitofp %159 : i32 to f32
      %cst_63 = arith.constant 0.000000e+00 : f32
      %161 = vector.broadcast %cst_63 : f32 to vector<1x128xf32>
      %162 = tpu.concatenate %80, %141, %149, %157, %161, %161, %161, %161 in 0 : vector<1x128xf32>, vector<1x128xf32>, vector<1x128xf32>, vector<1x128xf32>, vector<1x128xf32>, vector<1x128xf32>, vector<1x128xf32>, vector<1x128xf32> -> vector<8x128xf32>
      %163 = vector.broadcast %160 : f32 to vector<8x128xf32>
      %164 = arith.mulf %163, %162 : vector<8x128xf32>
      %c0_64 = arith.constant 0 : index
      %c0_65 = arith.constant 0 : index
      %c0_66 = arith.constant 0 : index
      %165 = vector.load %arg6[%c0_64, %c0_65, %c0_66] : memref<1x8x128xf32, #tpu.memory_space<vmem>>, vector<1x8x128xf32>
      %166 = vector.shape_cast %165 : vector<1x8x128xf32> to vector<8x128xf32>
      %167 = vector.shape_cast %164 : vector<8x128xf32> to vector<1x8x128xf32>
      tpu.vector_store %arg6[%c0_64, %c0_65, %c0_66], %167 {strides = array<i32>} : memref<1x8x128xf32, #tpu.memory_space<vmem>>, vector<1x8x128xf32>,
    } else {
    }
    %c0 = arith.constant 0 : index
    %c0_1 = arith.constant 0 : index
    %3 = vector.load %arg4[%c0, %c0_1] : memref<8x1152xbf16, #tpu.memory_space<vmem>>, vector<8x1152xbf16>
    %4 = arith.extf %3 : vector<8x1152xbf16> to vector<8x1152xf32>
    %c0_2 = arith.constant 0 : index
    %c0_3 = arith.constant 0 : index
    %5 = vector.load %arg5[%c0_2, %c0_3] : memref<8x1152xbf16, #tpu.memory_space<vmem>>, vector<8x1152xbf16>
    %6 = arith.extf %5 : vector<8x1152xbf16> to vector<8x1152xf32>
    %7 = arith.subf %4, %6 : vector<8x1152xf32>
    %8 = math.absf %7 : vector<8x1152xf32>
    %c2_i32 = arith.constant 2 : i32
    %9 = arith.muli %arg0, %c2_i32 : i32
    %10 = arith.addi %9, %arg2 : i32
    %11 = tpu.iota {dimensions = array<i32: 1>} : vector<1x1152xi32>
    %c1152_i32 = arith.constant 1152 : i32
    %12 = arith.muli %10, %c1152_i32 : i32
    %13 = vector.broadcast %12 : i32 to vector<1x1152xi32>
    %14 = arith.addi %11, %13 : vector<1x1152xi32>
    %c4500_i32 = arith.constant 4500 : i32
    %15 = vector.broadcast %c4500_i32 : i32 to vector<1x1152xi32>
    %16 = arith.cmpi slt, %14, %15 : vector<1x1152xi32>
    %cst = arith.constant 0.000000e+00 : f32
    %17 = vector.shape_cast %16 : vector<1x1152xi1> to vector<1x1152xi1>
    %18 = vector.broadcast %17 : vector<1x1152xi1> to vector<8x1152xi1>
    %19 = vector.broadcast %cst : f32 to vector<8x1152xf32>
    %20 = arith.select %18, %8, %19 : vector<8x1152xi1>, vector<8x1152xf32>
    %c0_4 = arith.constant 0 : index
    %c0_5 = arith.constant 0 : index
    %21 = vector.load %arg7[%c0_4, %c0_5] : memref<8x1xf32, #tpu.memory_space<vmem>>, vector<8x1xf32>
    %cst_6 = arith.constant dense<0.000000e+00> : vector<8xf32>
    %22 = vector.multi_reduction <add>, %20, %cst_6 [1] : vector<8x1152xf32> to vector<8xf32>
    %23 = vector.shape_cast %22 : vector<8xf32> to vector<8x1xf32>
    %24 = arith.addf %21, %23 : vector<8x1xf32>
    %c0_7 = arith.constant 0 : index
    %c0_8 = arith.constant 0 : index
    %25 = vector.load %arg7[%c0_7, %c0_8] : memref<8x1xf32, #tpu.memory_space<vmem>>, vector<8x1xf32>
    tpu.vector_store %arg7[%c0_7, %c0_8], %24 {strides = array<i32>} : memref<8x1xf32, #tpu.memory_space<vmem>>, vector<8x1xf32>,
    %c1_i32 = arith.constant 1 : i32
    %26 = arith.cmpi eq, %arg2, %c1_i32 : i32
    %27 = arith.extui %26 : i1 to i32
    %c0_i32_9 = arith.constant 0 : i32
    %28 = arith.cmpi ne, %27, %c0_i32_9 : i32
    scf.if %28 {
      %c0_10 = arith.constant 0 : index
      %c0_11 = arith.constant 0 : index
      %29 = vector.load %arg7[%c0_10, %c0_11] : memref<8x1xf32, #tpu.memory_space<vmem>>, vector<8x1xf32>
      %cst_12 = arith.constant 0.000000e+00 : f32
      %30 = vector.broadcast %cst_12 : f32 to vector<120x1xf32>
      %31 = tpu.concatenate %29, %30 in 0 : vector<8x1xf32>, vector<120x1xf32> -> vector<128x1xf32>
      %32 = vector.shape_cast %31 : vector<128x1xf32> to vector<128x1xf32>
      %33 = vector.broadcast %32 : vector<128x1xf32> to vector<128x128xf32>
      %34 = tpu.transpose %33, [1, 0] : vector<128x128xf32> -> vector<128x128xf32>
      %35 = vector.extract_strided_slice %34 {offsets = [0, 0], sizes = [1, 128], strides = [1, 1]} : vector<128x128xf32> to vector<1x128xf32>
      %c0_13 = arith.constant 0 : index
      %c0_14 = arith.constant 0 : index
      %c0_15 = arith.constant 0 : index
      %36 = vector.load %arg6[%c0_13, %c0_14, %c0_15] : memref<1x8x128xf32, #tpu.memory_space<vmem>>, vector<1x8x128xf32>
      %37 = vector.shape_cast %36 : vector<1x8x128xf32> to vector<8x128xf32>
      %38 = vector.extract_strided_slice %37 {offsets = [0, 0], sizes = [4, 128], strides = [1, 1]} : vector<8x128xf32> to vector<4x128xf32>
      %cst_16 = arith.constant 0.000000e+00 : f32
      %39 = vector.broadcast %cst_16 : f32 to vector<3x128xf32>
      %40 = tpu.concatenate %38, %35, %39 in 0 : vector<4x128xf32>, vector<1x128xf32>, vector<3x128xf32> -> vector<8x128xf32>
      %c0_17 = arith.constant 0 : index
      %c0_18 = arith.constant 0 : index
      %c0_19 = arith.constant 0 : index
      %41 = vector.load %arg6[%c0_17, %c0_18, %c0_19] : memref<1x8x128xf32, #tpu.memory_space<vmem>>, vector<1x8x128xf32>
      %42 = vector.shape_cast %41 : vector<1x8x128xf32> to vector<8x128xf32>
      %43 = vector.shape_cast %40 : vector<8x128xf32> to vector<1x8x128xf32>
      tpu.vector_store %arg6[%c0_17, %c0_18, %c0_19], %43 {strides = array<i32>} : memref<1x8x128xf32, #tpu.memory_space<vmem>>, vector<1x8x128xf32>,
    } else {
    }
    return
  }
  func.func @transform_0(%arg0: i32, %arg1: i32, %arg2: i32) -> (i32, i32, i32) {
    %c0_i32 = arith.constant 0 : i32
    %c0_i32_0 = arith.constant 0 : i32
    %c0_i32_1 = arith.constant 0 : i32
    return %arg1, %c0_i32, %c0_i32_0 : i32, i32, i32
  }
  func.func @transform_1(%arg0: i32, %arg1: i32, %arg2: i32) -> (i32, i32) {
    %c2_i32 = arith.constant 2 : i32
    %0 = arith.muli %arg0, %c2_i32 : i32
    %1 = arith.addi %0, %arg2 : i32
    %c0_i32 = arith.constant 0 : i32
    return %arg1, %1 : i32, i32
  }
  func.func @transform_2(%arg0: i32, %arg1: i32, %arg2: i32) -> (i32, i32) {
    %c2_i32 = arith.constant 2 : i32
    %0 = arith.muli %arg0, %c2_i32 : i32
    %1 = arith.addi %0, %arg2 : i32
    %c0_i32 = arith.constant 0 : i32
    return %arg1, %1 : i32, i32
  }
  func.func @transform_3(%arg0: i32, %arg1: i32, %arg2: i32) -> (i32, i32, i32) {
    %c0_i32 = arith.constant 0 : i32
    %c0_i32_0 = arith.constant 0 : i32
    return %arg0, %c0_i32, %arg1 : i32, i32, i32
  }
}

</mosaic_0001>

<llo_original>
// kernel: tpu_custom_call.1
$region0: #{tpu_custom_call.1}
  #allocation0 [shape = 'u32[]', space=smem, size = 0x4, offset = 0x4, fixed_abs, tag = 'smem constant byte address 0x4 - core index']
  #allocation1 [shape = 'u32[144,128]{1,0:T(1,128)}', space=vmem, size = 0x12000, scoped, tag = 'internal scratch']
  #allocation2 [shape = 'f32[8,1]{1,0:T(8,128)}', space=vmem, size = 0x1000, scoped, tag = 'scratch operand']
  %s0 = inlined_call_operand.hbm [shape: f32[1,712,128], index: 0, kind: input, shape index: {}]
  %s1 = inlined_call_operand.hbm [shape: bf16[8,4500], index: 1, kind: input, shape index: {}]
  %s2 = inlined_call_operand.hbm [shape: bf16[8,4500], index: 2, kind: input, shape index: {}]
  %s3 = inlined_call_operand.hbm [shape: f32[2,8,128], index: 3, kind: output, shape index: {}]
  %s4 = sld [smem:[#allocation0]]
  $region65: #{tpu_custom_call.1} parent=0
    _
  %s6 = ssub.s32 1, %s4
  %s7 = scalar_select 0, %s6, %s4
  $region1: #{tpu_custom_call.1} parent=0
    #allocation3 [shape = 'u8[364544]{0}', space=vmem, size = 0x59000, scoped, tag = 'input window, operand 0, single buffered']
    #allocation4 [shape = 's32[2]{0}', space=sflag, size = 0x8, scoped, tag = 'scoped memory for tpu_custom_call.1']
    #allocation5 [shape = 's32[2]{0}', space=sflag, size = 0x8, scoped, tag = 'scoped memory for tpu_custom_call.1']
    #allocation6 [shape = 'u8[36864]{0}', space=vmem, size = 0x9000, scoped, tag = 'input window, operand 1']
    #allocation7 [shape = 's32[2]{0}', space=sflag, size = 0x8, scoped, tag = 'scoped memory for tpu_custom_call.1']
    #allocation8 [shape = 'u8[36864]{0}', space=vmem, size = 0x9000, scoped, tag = 'input window, operand 2']
    #allocation9 [shape = 'u8[8192]{0}', space=vmem, size = 0x2000, scoped, tag = 'output window, operand 0']
    %8 = vsyncpa [#allocation4], 0
    %9 = vsyncpa [#allocation7], 0
    %s10 = scalar_lea.sflag [#allocation7], 1
    %11 = vsyncpa %s10, 0
    %12 = vsyncpa [#allocation5], 0
    %s13 = scalar_lea.sflag [#allocation5], 1
    %14 = vsyncpa %s13, 0
    loop: start=0, step=1, limit=6
    $region2: #{tpu_custom_call.1} parent=1 // loop_pre_header
      _
    $region3: #{tpu_custom_call.1} parent=1 // loop_header
      %s16 = sphi 0, %s20
      %p17 = scmp.ge.s32.totalorder %s16, 6
      %s23 = sphi 0, %s42
      %s24 = sphi 0, %s38
      %s25 = sphi 0, %s34
      %s26 = sphi 0, %s23
      %s27 = sphi 0, %s24
      %s28 = sphi 0, %s25
      %s29 = sphi 0, %s26
      %s30 = sphi 0, %s27
      %s31 = sphi 0, %s28
      %s45 = sphi 0, %s47
      %s48 = sphi 0, %s45
      %s49 = sphi 0, %s48
      %s65 = sphi 0, %s49
      %s77 = sphi 0, %s79
      %s80 = sphi 0, %s77
      %s81 = sphi 0, %s80
      %s97 = sphi 0, %s81
      %s109 = sphi 0, %s111
      %s112 = sphi 0, %s109
      %s113 = sphi 0, %s112
      %s129 = sphi 0, %s113
      %s137 = sphi 0, %s139
      %s140 = sphi 0, %s137
      %s141 = sphi 0, %s140
      %s157 = sphi 0, %s141
    $region4: #{tpu_custom_call.1} parent=1 // loop_header_branch
      %19 = sbr.rel (%p17) target = $region8
    $region5: #{tpu_custom_call.1} parent=1 // loop_body
      %s21 = ssub.s32 %s16, 1
      %s22 = ssub.s32 %s16, 2
      %s32 = sadd.s32 1, %s25
      %p33 = scmp.ge.s32.totalorder %s32, 2
      %s34 = scalar_select %p33, 0, %s32
      %s35 = sadd.s32 1, %s24
      %s36 = scalar_select %p33, %s35, %s24
      %p37 = scmp.ge.s32.totalorder %s36, 1
      %s38 = scalar_select %p37, 0, %s36
      %s39 = sadd.s32 1, %s23
      %s40 = scalar_select %p37, %s39, %s23
      %p41 = scmp.ge.s32.totalorder %s40, 2
      %s42 = scalar_select %p41, 0, %s40
      %s43 = ssub.s32 %s24, %s38
      %p44 = scmp.eq.s32.totalorder %s43, 0
      %s46 = sadd.s32 %s45, 1
      %s47 = scalar_select %p44, %s45, %s46
      %p50 = pneg %p44
      %p51 = scmp.eq.s32.totalorder %s16, 3
      %p52 = por %p50, %p51
      %p53 = scmp.ne.s32.totalorder %s45, %s48
      %p54 = scmp.eq.s32.totalorder %s16, 0
      %p55 = por %p53, %p54
      %p56 = scmp.ne.s32.totalorder %s45, %s48
      %p57 = scmp.eq.s32.totalorder %s21, 3
      %p58 = por %p56, %p57
      %p59 = scmp.ne.s32.totalorder %s48, %s49
      %p60 = scmp.eq.s32.totalorder %s21, 0
      %p61 = por %p59, %p60
      %p62 = scmp.ne.s32.totalorder %s48, %s49
      %p63 = scmp.eq.s32.totalorder %s22, 3
      %p64 = por %p62, %p63
      %p66 = scmp.ne.s32.totalorder %s49, %s65
      %p67 = scmp.eq.s32.totalorder %s22, 0
      %p68 = por %p66, %p67
      %s69 = smul.u32 %s23, 2
      %s70 = sadd.s32 %s69, %s25
      %s71 = smul.u32 %s42, 2
      %s72 = sadd.s32 %s71, %s34
      %s73 = ssub.s32 %s24, %s38
      %s74 = ssub.s32 %s70, %s72
      %s75 = sor.u32 %s73, %s74
      %p76 = scmp.eq.s32.totalorder %s75, 0
      %s78 = sadd.s32 %s77, 1
      %s79 = scalar_select %p76, %s77, %s78
      %p82 = pneg %p76
      %p83 = scmp.eq.s32.totalorder %s16, 3
      %p84 = por %p82, %p83
      %p85 = scmp.ne.s32.totalorder %s77, %s80
      %p86 = scmp.eq.s32.totalorder %s16, 0
      %p87 = por %p85, %p86
      %p88 = scmp.ne.s32.totalorder %s77, %s80
      %p89 = scmp.eq.s32.totalorder %s21, 3
      %p90 = por %p88, %p89
      %p91 = scmp.ne.s32.totalorder %s80, %s81
      %p92 = scmp.eq.s32.totalorder %s21, 0
      %p93 = por %p91, %p92
      %p94 = scmp.ne.s32.totalorder %s80, %s81
      %p95 = scmp.eq.s32.totalorder %s22, 3
      %p96 = por %p94, %p95
      %p98 = scmp.ne.s32.totalorder %s81, %s97
      %p99 = scmp.eq.s32.totalorder %s22, 0
      %p100 = por %p98, %p99
      %s101 = smul.u32 %s23, 2
      %s102 = sadd.s32 %s101, %s25
      %s103 = smul.u32 %s42, 2
      %s104 = sadd.s32 %s103, %s34
      %s105 = ssub.s32 %s24, %s38
      %s106 = ssub.s32 %s102, %s104
      %s107 = sor.u32 %s105, %s106
      %p108 = scmp.eq.s32.totalorder %s107, 0
      %s110 = sadd.s32 %s109, 1
      %s111 = scalar_select %p108, %s109, %s110
      %p114 = pneg %p108
      %p115 = scmp.eq.s32.totalorder %s16, 3
      %p116 = por %p114, %p115
      %p117 = scmp.ne.s32.totalorder %s109, %s112
      %p118 = scmp.eq.s32.totalorder %s16, 0
      %p119 = por %p117, %p118
      %p120 = scmp.ne.s32.totalorder %s109, %s112
      %p121 = scmp.eq.s32.totalorder %s21, 3
      %p122 = por %p120, %p121
      %p123 = scmp.ne.s32.totalorder %s112, %s113
      %p124 = scmp.eq.s32.totalorder %s21, 0
      %p125 = por %p123, %p124
      %p126 = scmp.ne.s32.totalorder %s112, %s113
      %p127 = scmp.eq.s32.totalorder %s22, 3
      %p128 = por %p126, %p127
      %p130 = scmp.ne.s32.totalorder %s113, %s129
      %p131 = scmp.eq.s32.totalorder %s22, 0
      %p132 = por %p130, %p131
      %s133 = ssub.s32 %s23, %s42
      %s134 = ssub.s32 %s24, %s38
      %s135 = sor.u32 %s133, %s134
      %p136 = scmp.eq.s32.totalorder %s135, 0
      %s138 = sadd.s32 %s137, 1
      %s139 = scalar_select %p136, %s137, %s138
      %p142 = pneg %p136
      %p143 = scmp.eq.s32.totalorder %s16, 3
      %p144 = por %p142, %p143
      %p145 = scmp.ne.s32.totalorder %s137, %s140
      %p146 = scmp.eq.s32.totalorder %s16, 0
      %p147 = por %p145, %p146
      %p148 = scmp.ne.s32.totalorder %s137, %s140
      %p149 = scmp.eq.s32.totalorder %s21, 3
      %p150 = por %p148, %p149
      %p151 = scmp.ne.s32.totalorder %s140, %s141
      %p152 = scmp.eq.s32.totalorder %s21, 0
      %p153 = por %p151, %p152
      %p154 = scmp.ne.s32.totalorder %s140, %s141
      %p155 = scmp.eq.s32.totalorder %s22, 3
      %p156 = por %p154, %p155
      %p158 = scmp.ne.s32.totalorder %s141, %s157
      %p159 = scmp.eq.s32.totalorder %s22, 0
      %p160 = por %p158, %p159
      %p161 = scmp.le.s32.totalorder 1, %s16
      %p162 = scmp.lt.s32.totalorder %s16, 5
      %p163 = pnand %p161, %p162
      %p164 = pneg %p163
      // Predicated region
      $region9: #{tpu_custom_call.1} parent=5 // pred_check
        _
      $region10: #{tpu_custom_call.1} parent=5 // pred_check_branch
        %166 = sbr.rel (%p163) target = $region12
      $region11: #{tpu_custom_call.1} parent=5 // pred_region
        %s167 = ssub.s32 %s16, 1
        // Predicated region
        $region13: #{tpu_custom_call.1} parent=11 // pred_check
          %p168 = pneg %p61
        $region14: #{tpu_custom_call.1} parent=11 // pred_check_branch
          %170 = sbr.rel (%p168) target = $region16
        $region15: #{tpu_custom_call.1} parent=11 // pred_region
          %s172 = ssub.s32 11392, 11392
          %173 = vsyncadd [#allocation4], %s172
          %s174 = smul.addr %s27, 89
          %s175 = smul.addr %s174, 128
          %s176 = scalar_lea.hbm %s0, %s175
          %s177 = sshll.u32 [#allocation3], 4
          %s178 = int_to_ptr.vmem [resolvable:$true] %s177
          %183 = dma.hbm_to_vmem [thread:$0]  %s176, 11392, %s178, [#allocation4], 128, 128, 8
        $region16: #{tpu_custom_call.1} parent=11 // pred_fallthru
          _
      $region12: #{tpu_custom_call.1} parent=5 // pred_fallthru
        _
      %p184 = scmp.lt.s32.totalorder %s16, 4
      // Predicated region
      $region17: #{tpu_custom_call.1} parent=5 // pred_check
        %p185 = pneg %p184
      $region18: #{tpu_custom_call.1} parent=5 // pred_check_branch
        %187 = sbr.rel (%p185) target = $region20
      $region19: #{tpu_custom_call.1} parent=5 // pred_region
        // Predicated region
        $region21: #{tpu_custom_call.1} parent=19 // pred_check
          %p188 = pneg %p87
        $region22: #{tpu_custom_call.1} parent=19 // pred_check_branch
          %190 = sbr.rel (%p188) target = $region24
        $region23: #{tpu_custom_call.1} parent=19 // pred_region
          %s191 = sand.u32 %s16, 1
          %s192 = scalar_lea.sflag [#allocation7], %s191
          %s193 = sand.u32 %s77, 1
          %s194 = smul.addr %s193, 36
          %s195 = scalar_lea.vmem [#allocation6], %s194
          %s196 = smul.u32 %s23, 2
          %s197 = sadd.s32 %s196, %s25
          %s198 = smul.u32 9, %s197
          %s200 = ssub.s32 576, 576
          %201 = vsyncadd %s192, %s200
          %s202 = smul.addr %s24, 36
          %s203 = sadd.s32 %s198, %s202
          %s204 = smul.addr %s203, 64
          %s205 = scalar_lea.hbm %s1, %s204
          %s207 = sshll.u32 %s195, 4
          %s208 = int_to_ptr.vmem [resolvable:$true] %s207
          %210 = dma.hbm_to_vmem [thread:$0]  %s205, 576, %s208, %s192
        $region24: #{tpu_custom_call.1} parent=19 // pred_fallthru
          _
        // Predicated region
        $region25: #{tpu_custom_call.1} parent=19 // pred_check
          %p211 = pneg %p119
        $region26: #{tpu_custom_call.1} parent=19 // pred_check_branch
          %213 = sbr.rel (%p211) target = $region28
        $region27: #{tpu_custom_call.1} parent=19 // pred_region
          %s214 = sand.u32 %s16, 1
          %s215 = scalar_lea.sflag [#allocation7], %s214
          %s216 = sand.u32 %s109, 1
          %s217 = smul.addr %s216, 36
          %s218 = scalar_lea.vmem [#allocation8], %s217
          %s219 = smul.u32 %s23, 2
          %s220 = sadd.s32 %s219, %s25
          %s221 = smul.u32 9, %s220
          %s223 = ssub.s32 576, 576
          %224 = vsyncadd %s215, %s223
          %s225 = smul.addr %s24, 36
          %s226 = sadd.s32 %s221, %s225
          %s227 = smul.addr %s226, 64
          %s228 = scalar_lea.hbm %s2, %s227
          %s230 = sshll.u32 %s218, 4
          %s231 = int_to_ptr.vmem [resolvable:$true] %s230
          %233 = dma.hbm_to_vmem [thread:$0]  %s228, 576, %s231, %s215
        $region28: #{tpu_custom_call.1} parent=19 // pred_fallthru
          _
      $region20: #{tpu_custom_call.1} parent=5 // pred_fallthru
        _
      %p234 = scmp.le.s32.totalorder 1, %s16
      %p235 = scmp.lt.s32.totalorder %s16, 5
      %p236 = pnand %p234, %p235
      %p237 = pneg %p236
      // Predicated region
      $region29: #{tpu_custom_call.1} parent=5 // pred_check
        _
      $region30: #{tpu_custom_call.1} parent=5 // pred_check_branch
        %239 = sbr.rel (%p236) target = $region32
      $region31: #{tpu_custom_call.1} parent=5 // pred_region
        %s240 = ssub.s32 %s16, 1
        // Predicated region
        $region33: #{tpu_custom_call.1} parent=31 // pred_check
          %p241 = pneg %p61
        $region34: #{tpu_custom_call.1} parent=31 // pred_check_branch
          %243 = sbr.rel (%p241) target = $region36
        $region35: #{tpu_custom_call.1} parent=31 // pred_region
          %244 = dma.done [#allocation4], 11392
        $region36: #{tpu_custom_call.1} parent=31 // pred_fallthru
          _
        %s245 = sand.u32 %s21, 1
        %s246 = scalar_lea.sflag [#allocation7], %s245
        %s247 = sand.u32 %s80, 1
        %s248 = smul.addr %s247, 36
        %s249 = scalar_lea.vmem [#allocation6], %s248
        // Predicated region
        $region37: #{tpu_custom_call.1} parent=31 // pred_check
          %p250 = pneg %p93
        $region38: #{tpu_custom_call.1} parent=31 // pred_check_branch
          %252 = sbr.rel (%p250) target = $region40
        $region39: #{tpu_custom_call.1} parent=31 // pred_region
          %253 = dma.done %s246, 576
        $region40: #{tpu_custom_call.1} parent=31 // pred_fallthru
          _
        %s254 = sand.u32 %s21, 1
        %s255 = scalar_lea.sflag [#allocation7], %s254
        %s256 = sand.u32 %s112, 1
        %s257 = smul.addr %s256, 36
        %s258 = scalar_lea.vmem [#allocation8], %s257
        // Predicated region
        $region41: #{tpu_custom_call.1} parent=31 // pred_check
          %p259 = pneg %p125
        $region42: #{tpu_custom_call.1} parent=31 // pred_check_branch
          %261 = sbr.rel (%p259) target = $region44
        $region43: #{tpu_custom_call.1} parent=31 // pred_region
          %262 = dma.done %s255, 576
        $region44: #{tpu_custom_call.1} parent=31 // pred_fallthru
          _
        %p263 = pneg %p61
        %p264 = pneg %p58
        %s265 = sand.u32 %s21, 1
        %s266 = scalar_lea.sflag [#allocation7], %s265
        %s267 = sand.u32 %s80, 1
        %s268 = smul.addr %s267, 36
        %s269 = scalar_lea.vmem [#allocation6], %s268
        %p270 = pneg %p93
        %p271 = pneg %p90
        %s272 = sand.u32 %s21, 1
        %s273 = scalar_lea.sflag [#allocation7], %s272
        %s274 = sand.u32 %s112, 1
        %s275 = smul.addr %s274, 36
        %s276 = scalar_lea.vmem [#allocation8], %s275
        %p277 = pneg %p125
        %p278 = pneg %p122
        %p279 = pneg %p153
        %p280 = pneg %p150
        %s281 = sand.u32 %s140, 1
        %s282 = scalar_lea.sflag [#allocation5], %s281
        %s283 = sand.u32 %s140, 1
        %s284 = smul.addr %s283, 8
        %s285 = scalar_lea.vmem [#allocation9], %s284
        %s286 = smul.u32 %s26, 2
        %s287 = sadd.s32 %s286, %s28
        %s288 = smul.u32 9, %s287
        %s289 = smul.u32 %s26, 2
        %s290 = sadd.s32 %s289, %s28
        %s291 = smul.u32 9, %s290
        %p292 = scmp.eq.s32.totalorder %s28, 0
        // Predicated region
        $region45: #{tpu_custom_call.1} parent=31 // pred_check
          %p293 = pneg %p292
        $region46: #{tpu_custom_call.1} parent=31 // pred_check_branch
          %295 = sbr.rel (%p293) target = $region48
        $region47: #{tpu_custom_call.1} parent=31 // pred_region
          %vm296 = vcmask 7168
          %297 = vst.msk [vmem:[#allocation2] sm:$0xff] %vm296, 0.0
          %v298 = vld [vmem:[#allocation3] sm:$0xff]
          %v299 = vld [vmem:[#allocation3 + $0x8] sm:$0xff]
          %v300 = vld [vmem:[#allocation3 + $0x10] sm:$0xff]
          %v301 = vld [vmem:[#allocation3 + $0x18] sm:$0xff]
          %v302 = vld [vmem:[#allocation3 + $0x20] sm:$0xff]
          %v303 = vld [vmem:[#allocation3 + $0x28] sm:$0xff]
          %v304 = vld [vmem:[#allocation3 + $0x30] sm:$0xff]
          %v305 = vld [vmem:[#allocation3 + $0x38] sm:$0xff]
          %v306 = vld [vmem:[#allocation3 + $0x40] sm:$0xff]
          %v307 = vld [vmem:[#allocation3 + $0x2c0] sm:$0xff]
          %v308 = vlaneseq
          %v309 = vshrl.u32 %v308, 7
          %v310 = vsub.s32 2, %v309
          %v311 = vrot.slane %v307, %v310
          %v312 = vadd.f32 %v304, %v311
          %v313 = vadd.f32 %v305, %v311
          %v314 = vadd.f32 %v306, %v311
          %v315 = vrcp.pop %v312
          %v316 = vrcp.pop %v313
          %v317 = vrcp.pop %v314
          %v318 = vlaneseq
          %v319 = vshrl.u32 %v318, 7
          %v320 = vsub.s32 0, %v319
          %v321 = vrot.slane %v307, %v320
          %v322 = vadd.f32 %v298, %v321
          %v323 = vadd.f32 %v299, %v321
          %v324 = vadd.f32 %v300, %v321
          %v325 = vmul.f32 %v322, 1000.0
          %v326 = vmul.f32 %v323, 1000.0
          %v327 = vmul.f32 %v324, 1000.0
          %v328 = vmul.f32 %v325, %v315
          %v329 = vmul.f32 %v326, %v316
          %v330 = vmul.f32 %v327, %v317
          %v331 = vmul.f32 %v328, 0.015625
          %v332 = vmul.f32 %v329, 0.015625
          %v333 = vmul.f32 %v330, 0.015625
          %v334 = vadd.f32 %v331, 0.5
          %v335 = vadd.f32 %v332, 0.5
          %v336 = vadd.f32 %v333, 0.5
          %v337 = vlaneseq
          %v338 = vshrl.u32 %v337, 7
          %v339 = vsub.s32 1, %v338
          %v340 = vrot.slane %v307, %v339
          %v341 = vadd.f32 %v301, %v340
          %v342 = vadd.f32 %v302, %v340
          %v343 = vadd.f32 %v303, %v340
          %v344 = vmul.f32 %v341, 1000.0
          %v345 = vmul.f32 %v342, 1000.0
          %v346 = vmul.f32 %v343, 1000.0
          %v347 = vmul.f32 %v344, %v315
          %v348 = vmul.f32 %v345, %v316
          %v349 = vmul.f32 %v346, %v317
          %v350 = vmul.f32 %v347, 0.015625
          %v351 = vmul.f32 %v348, 0.015625
          %v352 = vmul.f32 %v349, 0.015625
          %v353 = vadd.f32 %v350, 0.5
          %v354 = vadd.f32 %v351, 0.5
          %v355 = vadd.f32 %v352, 0.5
          %v356 = vld [vmem:[#allocation3 + $0x48] sm:$0xff]
          %v357 = vld [vmem:[#allocation3 + $0x50] sm:$0xff]
          %v358 = vld [vmem:[#allocation3 + $0x58] sm:$0xff]
          %v359 = vmul.f32 %v356, 0.015625
          %v360 = vmul.f32 %v357, 0.015625
          %v361 = vmul.f32 %v358, 0.015625
          %v362 = vld [vmem:[#allocation3 + $0x60] sm:$0xff]
          %v363 = vld [vmem:[#allocation3 + $0x68] sm:$0xff]
          %v364 = vld [vmem:[#allocation3 + $0x70] sm:$0xff]
          %v365 = vmul.f32 %v362, 0.015625
          %v366 = vmul.f32 %v363, 0.015625
          %v367 = vmul.f32 %v364, 0.015625
          %v368 = vld [vmem:[#allocation3 + $0x78] sm:$0xff]
          %v369 = vld [vmem:[#allocation3 + $0x80] sm:$0xff]
          %v370 = vld [vmem:[#allocation3 + $0x88] sm:$0xff]
          %v371 = vsub.f32 %v334, %v359
          %v372 = vsub.f32 %v335, %v360
          %v373 = vsub.f32 %v336, %v361
          %v374 = vand.u32 2147483647, %v371
          %v375 = vand.u32 2147483647, %v372
          %v376 = vand.u32 2147483647, %v373
          %v377 = vsub.f32 %v353, %v365
          %v378 = vsub.f32 %v354, %v366
          %v379 = vsub.f32 %v355, %v367
          %v380 = vand.u32 2147483647, %v377
          %v381 = vand.u32 2147483647, %v378
          %v382 = vand.u32 2147483647, %v379
          %v383 = vadd.f32 %v374, %v380
          %v384 = vadd.f32 %v375, %v381
          %v385 = vadd.f32 %v376, %v382
          %v386 = vmul.f32 %v368, %v383
          %v387 = vmul.f32 %v369, %v384
          %v388 = vmul.f32 %v370, %v385
          %v389 = vadd.f32 %v386, %v387
          %v390 = vadd.f32 %v389, %v388
          %v391 = vrot.slane %v390, 4
          %v392 = vadd.f32 %v390, %v391
          %v393 = vrot.slane %v392, 2
          %v394 = vadd.f32 %v392, %v393
          %v395 = vrot.slane %v394, 1
          %v396 = vadd.f32 %v394, %v395
          %v397 = vld [vmem:[#allocation3 + $0x90] sm:$0xff]
          %v398 = vld [vmem:[#allocation3 + $0x98] sm:$0xff]
          %v399 = vld [vmem:[#allocation3 + $0xa0] sm:$0xff]
          %v400 = vld [vmem:[#allocation3 + $0xa8] sm:$0xff]
          %v401 = vld [vmem:[#allocation3 + $0xb0] sm:$0xff]
          %v402 = vld [vmem:[#allocation3 + $0xb8] sm:$0xff]
          %v403 = vld [vmem:[#allocation3 + $0xc0] sm:$0xff]
          %v404 = vld [vmem:[#allocation3 + $0xc8] sm:$0xff]
          %v405 = vld [vmem:[#allocation3 + $0xd0] sm:$0xff]
          %v406 = vld [vmem:[#allocation3 + $0xd8] sm:$0xff]
          %v407 = vld [vmem:[#allocation3 + $0xe0] sm:$0xff]
          %v408 = vld [vmem:[#allocation3 + $0xe8] sm:$0xff]
          %v410 = vrot.slane %v397, 1
          %v412 = vadd.f32 %v397, %v410
          %v413 = vmul.f32 %v412, 0.5
          %v415 = vrot.slane %v400, 1
          %v417 = vadd.f32 %v400, %v415
          %v418 = vmul.f32 %v417, 0.5
          %v420 = vrot.slane %v403, 1
          %v422 = vadd.f32 %v403, %v420
          %v423 = vmul.f32 %v422, 0.5
          %v425 = vrot.slane %v298, 1
          %v427 = vadd.f32 %v298, %v425
          %v428 = vmul.f32 %v427, 0.5
          %v430 = vrot.slane %v301, 1
          %v432 = vadd.f32 %v301, %v430
          %v433 = vmul.f32 %v432, 0.5
          %v435 = vrot.slane %v304, 1
          %v437 = vadd.f32 %v304, %v435
          %v438 = vmul.f32 %v437, 0.5
          %v439 = vlaneseq
          %v440 = vshrl.u32 %v439, 7
          %v441 = vsub.s32 2, %v440
          %v442 = vrot.slane %v428, %v441
          %v443 = vsub.f32 %v298, %v442
          %v444 = vsub.f32 %v299, %v442
          %v445 = vsub.f32 %v300, %v442
          %v446 = vlaneseq
          %v447 = vshrl.u32 %v446, 7
          %v448 = vsub.s32 2, %v447
          %v449 = vrot.slane %v413, %v448
          %v450 = vsub.f32 %v397, %v449
          %v451 = vsub.f32 %v398, %v449
          %v452 = vsub.f32 %v399, %v449
          %v453 = vsub.f32 %v443, %v450
          %v454 = vsub.f32 %v444, %v451
          %v455 = vsub.f32 %v445, %v452
          %v456 = vlaneseq
          %v457 = vshrl.u32 %v456, 7
          %v458 = vsub.s32 2, %v457
          %v459 = vrot.slane %v433, %v458
          %v460 = vsub.f32 %v301, %v459
          %v461 = vsub.f32 %v302, %v459
          %v462 = vsub.f32 %v303, %v459
          %v463 = vlaneseq
          %v464 = vshrl.u32 %v463, 7
          %v465 = vsub.s32 2, %v464
          %v466 = vrot.slane %v418, %v465
          %v467 = vsub.f32 %v400, %v466
          %v468 = vsub.f32 %v401, %v466
          %v469 = vsub.f32 %v402, %v466
          %v470 = vsub.f32 %v460, %v467
          %v471 = vsub.f32 %v461, %v468
          %v472 = vsub.f32 %v462, %v469
          %v473 = vlaneseq
          %v474 = vshrl.u32 %v473, 7
          %v475 = vsub.s32 2, %v474
          %v476 = vrot.slane %v438, %v475
          %v477 = vsub.f32 %v304, %v476
          %v478 = vsub.f32 %v305, %v476
          %v479 = vsub.f32 %v306, %v476
          %v480 = vlaneseq
          %v481 = vshrl.u32 %v480, 7
          %v482 = vsub.s32 2, %v481
          %v483 = vrot.slane %v423, %v482
          %v484 = vsub.f32 %v403, %v483
          %v485 = vsub.f32 %v404, %v483
          %v486 = vsub.f32 %v405, %v483
          %v487 = vsub.f32 %v477, %v484
          %v488 = vsub.f32 %v478, %v485
          %v489 = vsub.f32 %v479, %v486
          %v490 = vand.u32 2147483647, %v453
          %v491 = vand.u32 2147483647, %v454
          %v492 = vand.u32 2147483647, %v455
          %v493 = vand.u32 2147483647, %v470
          %v494 = vand.u32 2147483647, %v471
          %v495 = vand.u32 2147483647, %v472
          %v496 = vadd.f32 %v490, %v493
          %v497 = vadd.f32 %v491, %v494
          %v498 = vadd.f32 %v492, %v495
          %v499 = vand.u32 2147483647, %v487
          %v500 = vand.u32 2147483647, %v488
          %v501 = vand.u32 2147483647, %v489
          %v502 = vadd.f32 %v496, %v499
          %v503 = vadd.f32 %v497, %v500
          %v504 = vadd.f32 %v498, %v501
          %v505 = vmul.f32 %v406, %v502
          %v506 = vmul.f32 %v407, %v503
          %v507 = vmul.f32 %v408, %v504
          %v508 = vadd.f32 %v505, %v506
          %v509 = vadd.f32 %v508, %v507
          %v510 = vrot.slane %v509, 4
          %v511 = vadd.f32 %v509, %v510
          %v512 = vrot.slane %v511, 2
          %v513 = vadd.f32 %v511, %v512
          %v514 = vrot.slane %v513, 1
          %v515 = vadd.f32 %v513, %v514
          %v516 = vld [vmem:[#allocation3 + $0xf0] sm:$0xff]
          %v517 = vld [vmem:[#allocation3 + $0xf8] sm:$0xff]
          %v518 = vld [vmem:[#allocation3 + $0x100] sm:$0xff]
          %v519 = vld [vmem:[#allocation3 + $0x108] sm:$0xff]
          %v520 = vld [vmem:[#allocation3 + $0x110] sm:$0xff]
          %v521 = vld [vmem:[#allocation3 + $0x118] sm:$0xff]
          %v522 = vld [vmem:[#allocation3 + $0x120] sm:$0xff]
          %v523 = vld [vmem:[#allocation3 + $0x128] sm:$0xff]
          %v524 = vld [vmem:[#allocation3 + $0x130] sm:$0xff]
          %v525 = vld [vmem:[#allocation3 + $0x138] sm:$0xff]
          %v526 = vld [vmem:[#allocation3 + $0x140] sm:$0xff]
          %v527 = vld [vmem:[#allocation3 + $0x148] sm:$0xff]
          %v528 = vld [vmem:[#allocation3 + $0x150] sm:$0xff]
          %v529 = vld [vmem:[#allocation3 + $0x158] sm:$0xff]
          %v530 = vld [vmem:[#allocation3 + $0x160] sm:$0xff]
          %v531 = vld [vmem:[#allocation3 + $0x168] sm:$0xff]
          %v532 = vld [vmem:[#allocation3 + $0x170] sm:$0xff]
          %v533 = vld [vmem:[#allocation3 + $0x178] sm:$0xff]
          %v534 = vld [vmem:[#allocation3 + $0x180] sm:$0xff]
          %v535 = vld [vmem:[#allocation3 + $0x188] sm:$0xff]
          %v536 = vld [vmem:[#allocation3 + $0x190] sm:$0xff]
          %v537 = vld [vmem:[#allocation3 + $0x198] sm:$0xff]
          %v538 = vld [vmem:[#allocation3 + $0x1a0] sm:$0xff]
          %v539 = vld [vmem:[#allocation3 + $0x1a8] sm:$0xff]
          %v540 = vld [vmem:[#allocation3 + $0x1b0] sm:$0xff]
          %v541 = vld [vmem:[#allocation3 + $0x1b8] sm:$0xff]
          %v542 = vld [vmem:[#allocation3 + $0x1c0] sm:$0xff]
          %v543 = vld [vmem:[#allocation3 + $0x1c8] sm:$0xff]
          %v544 = vld [vmem:[#allocation3 + $0x1d0] sm:$0xff]
          %v545 = vld [vmem:[#allocation3 + $0x1d8] sm:$0xff]
          %v546 = vld [vmem:[#allocation3 + $0x1e0] sm:$0xff]
          %v547 = vld [vmem:[#allocation3 + $0x1e8] sm:$0xff]
          %v548 = vld [vmem:[#allocation3 + $0x1f0] sm:$0xff]
          %v549 = vld [vmem:[#allocation3 + $0x1f8] sm:$0xff]
          %v550 = vld [vmem:[#allocation3 + $0x200] sm:$0xff]
          %v551 = vld [vmem:[#allocation3 + $0x208] sm:$0xff]
          %v552 = vld [vmem:[#allocation3 + $0x210] sm:$0xff]
          %v553 = vld [vmem:[#allocation3 + $0x218] sm:$0xff]
          %v554 = vld [vmem:[#allocation3 + $0x220] sm:$0xff]
          %v555 = vld [vmem:[#allocation3 + $0x228] sm:$0xff]
          %v556 = vld [vmem:[#allocation3 + $0x230] sm:$0xff]
          %v557 = vld [vmem:[#allocation3 + $0x238] sm:$0xff]
          %v558 = vld [vmem:[#allocation3 + $0x240] sm:$0xff]
          %v559 = vld [vmem:[#allocation3 + $0x248] sm:$0xff]
          %v560 = vld [vmem:[#allocation3 + $0x250] sm:$0xff]
          %v561 = vld [vmem:[#allocation3 + $0x258] sm:$0xff]
          %v562 = vld [vmem:[#allocation3 + $0x260] sm:$0xff]
          %v563 = vld [vmem:[#allocation3 + $0x268] sm:$0xff]
          %v564 = vld [vmem:[#allocation3 + $0x270] sm:$0xff]
          %v565 = vld [vmem:[#allocation3 + $0x278] sm:$0xff]
          %v566 = vld [vmem:[#allocation3 + $0x280] sm:$0xff]
          %v567 = vld [vmem:[#allocation3 + $0x288] sm:$0xff]
          %v568 = vld [vmem:[#allocation3 + $0x290] sm:$0xff]
          %v569 = vld [vmem:[#allocation3 + $0x298] sm:$0xff]
          %v570 = vsub.f32 %v516, %v543
          %v571 = vsub.f32 %v517, %v544
          %v572 = vsub.f32 %v518, %v545
          %v573 = vsub.f32 %v519, %v546
          %v574 = vsub.f32 %v520, %v547
          %v575 = vsub.f32 %v521, %v548
          %v576 = vsub.f32 %v522, %v549
          %v577 = vsub.f32 %v523, %v550
          %v578 = vsub.f32 %v524, %v551
          %v579 = vsub.f32 %v525, %v552
          %v580 = vsub.f32 %v526, %v553
          %v581 = vsub.f32 %v527, %v554
          %v582 = vsub.f32 %v528, %v555
          %v583 = vsub.f32 %v529, %v556
          %v584 = vsub.f32 %v530, %v557
          %v585 = vsub.f32 %v531, %v558
          %v586 = vsub.f32 %v532, %v559
          %v587 = vsub.f32 %v533, %v560
          %v588 = vsub.f32 %v534, %v561
          %v589 = vsub.f32 %v535, %v562
          %v590 = vsub.f32 %v536, %v563
          %v591 = vsub.f32 %v537, %v564
          %v592 = vsub.f32 %v538, %v565
          %v593 = vsub.f32 %v539, %v566
          %v594 = vsub.f32 %v540, %v567
          %v595 = vsub.f32 %v541, %v568
          %v596 = vsub.f32 %v542, %v569
          %v597 = vmul.f32 %v570, %v570
          %v598 = vmul.f32 %v571, %v571
          %v599 = vmul.f32 %v572, %v572
          %v600 = vmul.f32 %v573, %v573
          %v601 = vmul.f32 %v574, %v574
          %v602 = vmul.f32 %v575, %v575
          %v603 = vmul.f32 %v576, %v576
          %v604 = vmul.f32 %v577, %v577
          %v605 = vmul.f32 %v578, %v578
          %v606 = vmul.f32 %v579, %v579
          %v607 = vmul.f32 %v580, %v580
          %v608 = vmul.f32 %v581, %v581
          %v609 = vmul.f32 %v582, %v582
          %v610 = vmul.f32 %v583, %v583
          %v611 = vmul.f32 %v584, %v584
          %v612 = vmul.f32 %v585, %v585
          %v613 = vmul.f32 %v586, %v586
          %v614 = vmul.f32 %v587, %v587
          %v615 = vmul.f32 %v588, %v588
          %v616 = vmul.f32 %v589, %v589
          %v617 = vmul.f32 %v590, %v590
          %v618 = vmul.f32 %v591, %v591
          %v619 = vmul.f32 %v592, %v592
          %v620 = vmul.f32 %v593, %v593
          %v621 = vmul.f32 %v594, %v594
          %v622 = vmul.f32 %v595, %v595
          %v623 = vmul.f32 %v596, %v596
          %v624 = vadd.f32 %v597, %v598
          %v625 = vadd.f32 %v624, %v599
          %v626 = vadd.f32 %v625, %v600
          %v627 = vadd.f32 %v626, %v601
          %v628 = vadd.f32 %v627, %v602
          %v629 = vadd.f32 %v628, %v603
          %v630 = vadd.f32 %v629, %v604
          %v631 = vadd.f32 %v630, %v605
          %v632 = vadd.f32 %v631, %v606
          %v633 = vadd.f32 %v632, %v607
          %v634 = vadd.f32 %v633, %v608
          %v635 = vadd.f32 %v634, %v609
          %v636 = vadd.f32 %v635, %v610
          %v637 = vadd.f32 %v636, %v611
          %v638 = vadd.f32 %v637, %v612
          %v639 = vadd.f32 %v638, %v613
          %v640 = vadd.f32 %v639, %v614
          %v641 = vadd.f32 %v640, %v615
          %v642 = vadd.f32 %v641, %v616
          %v643 = vadd.f32 %v642, %v617
          %v644 = vadd.f32 %v643, %v618
          %v645 = vadd.f32 %v644, %v619
          %v646 = vadd.f32 %v645, %v620
          %v647 = vadd.f32 %v646, %v621
          %v648 = vadd.f32 %v647, %v622
          %v649 = vadd.f32 %v648, %v623
          %v650 = vrot.slane %v649, 4
          %v651 = vadd.f32 %v649, %v650
          %v652 = vrot.slane %v651, 2
          %v653 = vadd.f32 %v651, %v652
          %v654 = vrot.slane %v653, 1
          %v655 = vadd.f32 %v653, %v654
          %v656 = vld [vmem:[#allocation3 + $0x2a0] sm:$0xff]
          %v657 = vld [vmem:[#allocation3 + $0x2a8] sm:$0xff]
          %v658 = vld [vmem:[#allocation3 + $0x2b0] sm:$0xff]
          %v659 = vld [vmem:[#allocation3 + $0x2b8] sm:$0xff]
          %v660 = vsub.f32 %v656, %v658
          %v661 = vsub.f32 %v657, %v659
          %v662 = vmul.f32 %v660, %v660
          %v663 = vmul.f32 %v661, %v661
          %v664 = vadd.f32 %v662, %v663
          %v665 = vrot.slane %v664, 4
          %v666 = vadd.f32 %v664, %v665
          %v667 = vrot.slane %v666, 2
          %v668 = vadd.f32 %v666, %v667
          %v669 = vrot.slane %v668, 1
          %v670 = vadd.f32 %v668, %v669
          %p671 = scmp.eq.s32.totalorder %s26, 0
          %s672 = scalar_select %p671, 1, 0
          %s673 = scvt.s32.f32 %s672
          %vm674 = vcmask 1040384
          %v675 = vsel %vm674, %v396, %v515
          %vm676 = vcmask 1041408
          %v677 = vsel %vm676, %v675, %v655
          %vm678 = vcmask 1042432
          %v679 = vsel %vm678, %v677, %v670
          %vm680 = vcmask 1043456
          %v681 = vsel %vm680, %v679, 0.0
          %vm682 = vcmask 1044480
          %v683 = vsel %vm682, %v681, 0.0
          %vm684 = vcmask 1045504
          %v685 = vsel %vm684, %v683, 0.0
          %vm686 = vcmask 1046528
          %v687 = vsel %vm686, %v685, 0.0
          %v688 = vstv %s673
          %v689 = vmul.f32 %v688, %v687
          %690 = vst [vmem:[%s285] sm:$0xff] %v689
        $region48: #{tpu_custom_call.1} parent=31 // pred_fallthru
          _
        %v691 = vld [vmem:[%s249] sm:$0xff]
        %v692 = vld [vmem:[%s249 + $0x8] sm:$0xff]
        %v693 = vld [vmem:[%s249 + $0x10] sm:$0xff]
        %v694 = vld [vmem:[%s249 + $0x18] sm:$0xff]
        %v695 = vld [vmem:[%s249 + $0x20] sm:$0xf]
        %v696 = vunpack.c.l.bf16 %v691
        %v697 = vunpack.c.h.bf16 %v691
        %v698 = vunpack.c.l.bf16 %v692
        %v699 = vunpack.c.h.bf16 %v692
        %v700 = vunpack.c.l.bf16 %v693
        %v701 = vunpack.c.h.bf16 %v693
        %v702 = vunpack.c.l.bf16 %v694
        %v703 = vunpack.c.h.bf16 %v694
        %v704 = vunpack.c.l.bf16 %v695
        %v705 = vld [vmem:[%s258] sm:$0xff]
        %v706 = vld [vmem:[%s258 + $0x8] sm:$0xff]
        %v707 = vld [vmem:[%s258 + $0x10] sm:$0xff]
        %v708 = vld [vmem:[%s258 + $0x18] sm:$0xff]
        %v709 = vld [vmem:[%s258 + $0x20] sm:$0xf]
        %v710 = vunpack.c.l.bf16 %v705
        %v711 = vunpack.c.h.bf16 %v705
        %v712 = vunpack.c.l.bf16 %v706
        %v713 = vunpack.c.h.bf16 %v706
        %v714 = vunpack.c.l.bf16 %v707
        %v715 = vunpack.c.h.bf16 %v707
        %v716 = vunpack.c.l.bf16 %v708
        %v717 = vunpack.c.h.bf16 %v708
        %v718 = vunpack.c.l.bf16 %v709
        %v719 = vsub.f32 %v696, %v710
        %v720 = vsub.f32 %v697, %v711
        %v721 = vsub.f32 %v698, %v712
        %v722 = vsub.f32 %v699, %v713
        %v723 = vsub.f32 %v700, %v714
        %v724 = vsub.f32 %v701, %v715
        %v725 = vsub.f32 %v702, %v716
        %v726 = vsub.f32 %v703, %v717
        %v727 = vsub.f32 %v704, %v718
        %v728 = vand.u32 2147483647, %v719
        %v729 = vand.u32 2147483647, %v720
        %v730 = vand.u32 2147483647, %v721
        %v731 = vand.u32 2147483647, %v722
        %v732 = vand.u32 2147483647, %v723
        %v733 = vand.u32 2147483647, %v724
        %v734 = vand.u32 2147483647, %v725
        %v735 = vand.u32 2147483647, %v726
        %v736 = vand.u32 2147483647, %v727
        %s737 = smul.u32 %s26, 2
        %s738 = sadd.s32 %s737, %s28
        %v739 = vlaneseq
        %v740 = vand.u32 %v739, 127
        %v741 = vadd.s32 %v740, 128
        %v742 = vadd.s32 %v740, 256
        %v743 = vadd.s32 %v740, 384
        %v744 = vadd.s32 %v740, 512
        %v745 = vadd.s32 %v740, 640
        %v746 = vadd.s32 %v740, 768
        %v747 = vadd.s32 %v740, 896
        %v748 = vadd.s32 %v740, 1024
        %s749 = smul.u32 %s738, 1152
        %v750 = vstv %s749
        %v751 = vadd.s32 %v740, %v750
        %v752 = vadd.s32 %v741, %v750
        %v753 = vadd.s32 %v742, %v750
        %v754 = vadd.s32 %v743, %v750
        %v755 = vadd.s32 %v744, %v750
        %v756 = vadd.s32 %v745, %v750
        %v757 = vadd.s32 %v746, %v750
        %v758 = vadd.s32 %v747, %v750
        %v759 = vadd.s32 %v748, %v750
        %vm760 = vcmp.lt.s32.totalorder %v751, 4500
        %vm761 = vcmp.lt.s32.totalorder %v752, 4500
        %vm762 = vcmp.lt.s32.totalorder %v753, 4500
        %vm763 = vcmp.lt.s32.totalorder %v754, 4500
        %vm764 = vcmp.lt.s32.totalorder %v755, 4500
        %vm765 = vcmp.lt.s32.totalorder %v756, 4500
        %vm766 = vcmp.lt.s32.totalorder %v757, 4500
        %vm767 = vcmp.lt.s32.totalorder %v758, 4500
        %vm768 = vcmp.lt.s32.totalorder %v759, 4500
        %v769 = vsel %vm760, 1, 0
        %v770 = vsel %vm761, 1, 0
        %v771 = vsel %vm762, 1, 0
        %v772 = vsel %vm763, 1, 0
        %v773 = vsel %vm764, 1, 0
        %v774 = vsel %vm765, 1, 0
        %v775 = vsel %vm766, 1, 0
        %v776 = vsel %vm767, 1, 0
        %v777 = vsel %vm768, 1, 0
        %vm778 = vcmp.eq.s32.totalorder %v769, 1
        %vm779 = vcmp.eq.s32.totalorder %v770, 1
        %vm780 = vcmp.eq.s32.totalorder %v771, 1
        %vm781 = vcmp.eq.s32.totalorder %v772, 1
        %vm782 = vcmp.eq.s32.totalorder %v773, 1
        %vm783 = vcmp.eq.s32.totalorder %v774, 1
        %vm784 = vcmp.eq.s32.totalorder %v775, 1
        %vm785 = vcmp.eq.s32.totalorder %v776, 1
        %vm786 = vcmp.eq.s32.totalorder %v777, 1
        %v787 = vsel %vm778, %v728, 0.0
        %v788 = vsel %vm779, %v729, 0.0
        %v789 = vsel %vm780, %v730, 0.0
        %v790 = vsel %vm781, %v731, 0.0
        %v791 = vsel %vm782, %v732, 0.0
        %v792 = vsel %vm783, %v733, 0.0
        %v793 = vsel %vm784, %v734, 0.0
        %v794 = vsel %vm785, %v735, 0.0
        %v795 = vsel %vm786, %v736, 0.0
        %v796 = vld [vmem:[#allocation2] sm:$0xff]
        %v797 = vadd.f32 %v787, %v788
        %v798 = vadd.f32 %v797, %v789
        %v799 = vadd.f32 %v798, %v790
        %v800 = vadd.f32 %v799, %v791
        %v801 = vadd.f32 %v800, %v792
        %v802 = vadd.f32 %v801, %v793
        %v803 = vadd.f32 %v802, %v794
        %v804 = vadd.f32 %v803, %v795
        %805 = vadd.xlane.f32.xlu0 %v804
        %v806 = vpop.xlane.xlu0 %805
        %v807 = vadd.f32 %v796, %v806
        %vm808 = vcmask 7168
        %809 = vst.msk [vmem:[#allocation2] sm:$0xff] %vm808, %v807
        %p810 = scmp.eq.s32.totalorder %s28, 1
        // Predicated region
        $region49: #{tpu_custom_call.1} parent=31 // pred_check
          %p811 = pneg %p810
        $region50: #{tpu_custom_call.1} parent=31 // pred_check_branch
          %813 = sbr.rel (%p811) target = $region52
        $region51: #{tpu_custom_call.1} parent=31 // pred_region
          %v814 = vld [vmem:[#allocation2] sm:$0xff]
          %816 = vset.pattern.permute.xlu0 0
          %817 = vperm.xlu0 %816, %v814
          %v818 = vpop.permute.xlu0 %817
          %821 = vset.pattern.permute.xlu0 0
          %822 = vperm.xlu0 %821, 0.0
          %v823 = vpop.permute.xlu0 %822
          %825 = vxpose.xlu0.b32.start [1/16] %v818, 128
          %826 = vxpose.xlu0.b32.cont [2/16] %v823, 128
          %827 = vxpose.xlu0.b32.cont [3/16] %v823, 128
          %828 = vxpose.xlu0.b32.cont [4/16] %v823, 128
          %829 = vxpose.xlu0.b32.cont [5/16] %v823, 128
          %830 = vxpose.xlu0.b32.cont [6/16] %v823, 128
          %831 = vxpose.xlu0.b32.cont [7/16] %v823, 128
          %832 = vxpose.xlu0.b32.cont [8/16] %v823, 128
          %833 = vxpose.xlu0.b32.cont [9/16] %v823, 128
          %834 = vxpose.xlu0.b32.cont [10/16] %v823, 128
          %835 = vxpose.xlu0.b32.cont [11/16] %v823, 128
          %836 = vxpose.xlu0.b32.cont [12/16] %v823, 128
          %837 = vxpose.xlu0.b32.cont [13/16] %v823, 128
          %838 = vxpose.xlu0.b32.cont [14/16] %v823, 128
          %839 = vxpose.xlu0.b32.cont [15/16] %v823, 128
          %840 = vxpose.xlu0.b32.end [16/16] %v823, 128
          %v841 = vpop.trf.xlu0
          %v842 = vpop.trf.xlu0
          %v843 = vpop.trf.xlu0
          %v844 = vpop.trf.xlu0
          %v845 = vpop.trf.xlu0
          %v846 = vpop.trf.xlu0
          %v847 = vpop.trf.xlu0
          %v848 = vpop.trf.xlu0
          %v849 = vpop.trf.xlu0
          %v850 = vpop.trf.xlu0
          %v851 = vpop.trf.xlu0
          %v852 = vpop.trf.xlu0
          %v853 = vpop.trf.xlu0
          %v854 = vpop.trf.xlu0
          %v855 = vpop.trf.xlu0
          %v856 = vpop.trf.xlu0
          %v857 = vld [vmem:[%s285] sm:$0xff]
          %v859 = vrot.slane %v841, 4
          %vm861 = vcmask 1043456
          %v862 = vsel %vm861, %v857, %v859
          %vm863 = vcmask 1044480
          %v864 = vsel %vm863, %v862, 0.0
          %865 = vst [vmem:[%s285] sm:$0xff] %v864
        $region52: #{tpu_custom_call.1} parent=31 // pred_fallthru
          _
        %s866 = sand.u32 %s140, 1
        %s867 = scalar_lea.sflag [#allocation5], %s866
        %s868 = sand.u32 %s140, 1
        %s869 = smul.addr %s868, 8
        %s870 = scalar_lea.vmem [#allocation9], %s869
        // Predicated region
        $region53: #{tpu_custom_call.1} parent=31 // pred_check
          %p871 = pneg %p150
        $region54: #{tpu_custom_call.1} parent=31 // pred_check_branch
          %873 = sbr.rel (%p871) target = $region56
        $region55: #{tpu_custom_call.1} parent=31 // pred_region
          %s875 = ssub.s32 128, 128
          %876 = vsyncadd %s867, %s875
          %s877 = sadd.s32 %s27, %s26
          %s878 = smul.addr %s877, 128
          %s879 = scalar_lea.hbm %s3, %s878
          %s881 = sshll.u32 %s870, 4
          %s882 = int_to_ptr.vmem [resolvable:$true] %s881
          %884 = dma.vmem_to_hbm [thread:$0]  %s882, 128, %s879, %s867
        $region56: #{tpu_custom_call.1} parent=31 // pred_fallthru
          _
      $region32: #{tpu_custom_call.1} parent=5 // pred_fallthru
        _
      %p885 = scmp.le.s32.totalorder 2, %s16
      // Predicated region
      $region57: #{tpu_custom_call.1} parent=5 // pred_check
        %p886 = pneg %p885
      $region58: #{tpu_custom_call.1} parent=5 // pred_check_branch
        %888 = sbr.rel (%p886) target = $region60
      $region59: #{tpu_custom_call.1} parent=5 // pred_region
        %s889 = ssub.s32 %s16, 2
        // Predicated region
        $region61: #{tpu_custom_call.1} parent=59 // pred_check
          %p890 = pneg %p156
        $region62: #{tpu_custom_call.1} parent=59 // pred_check_branch
          %892 = sbr.rel (%p890) target = $region64
        $region63: #{tpu_custom_call.1} parent=59 // pred_region
          %s893 = sand.u32 %s141, 1
          %s894 = scalar_lea.sflag [#allocation5], %s893
          %s895 = sand.u32 %s141, 1
          %s896 = smul.addr %s895, 8
          %s897 = scalar_lea.vmem [#allocation9], %s896
          %898 = dma.done %s894, 128
        $region64: #{tpu_custom_call.1} parent=59 // pred_fallthru
          _
      $region60: #{tpu_custom_call.1} parent=5 // pred_fallthru
        _
    $region6: #{tpu_custom_call.1} parent=1 // loop_footer
      %s20 = sadd.s32 1, %s16
    $region7: #{tpu_custom_call.1} parent=1 // loop_footer_branch
      %15 = sbr.rel target = $region3
    $region8: #{tpu_custom_call.1} parent=1 // loop_exit
      _
    %899 = vsyncpa [#allocation4], 1
    %s900 = scalar_lea.sflag [#allocation4], 1
    %901 = vsyncpa %s900, 1
    %902 = vsyncpa [#allocation7], 1
    %s903 = scalar_lea.sflag [#allocation7], 1
    %904 = vsyncpa %s903, 1
    %905 = vsyncpa [#allocation5], 1
    %s906 = scalar_lea.sflag [#allocation5], 1
    %907 = vsyncpa %s906, 1

</llo_original>
